<compile_context>
chip_gen: v7x
topology: tpu7x:2x2x1
jax: 0.10.0
libtpu: 0.0.40
codegen_flags: <defaults>
</compile_context>

<pallas_src>
import numpy as np
import jax
import jax.numpy as jnp
from jax.experimental import pallas as pl
from jax.experimental.pallas import tpu as pltpu

H, W = 64, 64            # image_size (small, vs. 256 default in neural_renderer)
ROWS, LANES = 32, 128    # lane-dense pixel tile: H*W = 4096 = 32 * 128
NUM_FACES = 12           # cube triangulation
VIEW_ANGLE_DEG = 30.0    # neural_renderer default viewing_angle
CAM_DISTANCE = 2.732
CAM_ELEVATION = 0.0
CAM_AZIMUTH = 90.0
DEGENERATE_EPS = 1e-6

# ----------------------------------------------------------------------------
# Static pixel-center coordinate planes (NDC, [-1, 1], y up) in the lane-dense
# (32, 128) layout.  Compile-time constants -> no in-kernel index math.
# ----------------------------------------------------------------------------
_rows = np.arange(H, dtype=np.float32)[:, None]          # (H, 1)
_cols = np.arange(W, dtype=np.float32)[None, :]          # (1, W)
_PX = np.broadcast_to((2.0 * _cols + 1.0) / W - 1.0, (H, W))
_PY = np.broadcast_to(1.0 - (2.0 * _rows + 1.0) / H, (H, W))
PX_LD = jnp.asarray(np.ascontiguousarray(_PX).reshape(ROWS, LANES))
PY_LD = jnp.asarray(np.ascontiguousarray(_PY).reshape(ROWS, LANES))


# ----------------------------------------------------------------------------
# Pallas kernel: hard silhouette rasterization + fused loss partial reduction.
# ----------------------------------------------------------------------------
def rasterize_loss_kernel(coef_ref, px_ref, py_ref, w_ref, loss_ref):
    # coef_ref : SMEM (NUM_FACES*9,) f32 — per face, 3 edges x (a, b, t) with
    #            inside <=> a*px + b*py >= t  (winding sign and -c folded in).
    # px_ref   : VMEM (ROWS, LANES) f32 — pixel-center x (NDC), lane-dense.
    # py_ref   : VMEM (ROWS, LANES) f32 — pixel-center y (NDC), lane-dense.
    # w_ref    : VMEM (ROWS, LANES) f32 — (1 - 2*image_ref), lane-dense.
    # loss_ref : VMEM (1, 1) f32 — sum(where(covered, 1-2*ref, 0)) partial loss.
    px = px_ref[...]
    py = py_ref[...]

    # Static unroll over the (small) face list.  Per-face scalars come from
    # SMEM (2 sld/cycle, hides under ~200+ VALU cycles); per-pixel edge tests
    # are pure VPU elementwise work.  Coverage accumulates as a boolean mask.
    covered = jnp.zeros((ROWS, LANES), jnp.bool_)
    for f in range(NUM_FACES):
        base = 9 * f
        inside = (coef_ref[base + 0] * px + coef_ref[base + 1] * py) >= coef_ref[base + 2]
        inside &= (coef_ref[base + 3] * px + coef_ref[base + 4] * py) >= coef_ref[base + 5]
        inside &= (coef_ref[base + 6] * px + coef_ref[base + 7] * py) >= coef_ref[base + 8]
        covered = jnp.logical_or(covered, inside)

    # Binary coverage => (cov - ref)^2 summed == sum(where(cov, 1-2*ref, 0)) + sum(ref^2);
    # the ref-only sum(ref^2) term is added outside the kernel.
    contrib = jnp.where(covered, w_ref[...], 0.0)
    loss_ref[...] = jnp.sum(contrib, keepdims=True)   # (1, 1)


# ----------------------------------------------------------------------------
# JAX glue: camera + projection + per-edge coefficient setup (tiny).
# ----------------------------------------------------------------------------
def get_points_from_angles(distance, elevation, azimuth):
    e = jnp.deg2rad(jnp.float32(elevation))
    a = jnp.deg2rad(jnp.float32(azimuth))
    return distance * jnp.array(
        [jnp.cos(e) * jnp.sin(a), jnp.sin(e), -jnp.cos(e) * jnp.cos(a)],
        jnp.float32,
    )


def look_at(vertices, eye):
    at = jnp.zeros((3,), jnp.float32)
    up = jnp.array([0.0, 1.0, 0.0], jnp.float32)
    z = at - eye
    z = z / jnp.linalg.norm(z)
    x = jnp.cross(up, z)
    x = x / jnp.linalg.norm(x)
    y = jnp.cross(z, x)
    y = y / jnp.linalg.norm(y)
    rot = jnp.stack([x, y, z])              # (3, 3)
    return (vertices - eye) @ rot.T


def perspective(vertices, angle_deg=VIEW_ANGLE_DEG):
    # TODO(synk): no near-plane / z>0 guard; fine for this fixed camera+cube.
    width = jnp.tan(jnp.deg2rad(jnp.float32(angle_deg)))
    z = vertices[:, 2]
    x = vertices[:, 0] / (z * width)
    y = vertices[:, 1] / (z * width)
    return jnp.stack([x, y, z], axis=1)


def edge_coefficients(faces_xy):
    # faces_xy: (F, 3, 2) projected triangles.
    # Edge function for edge i->j: e(p) = a*px + b*py + c, with
    #   a = yj - yi, b = -(xj - xi), c = xj*yi - xi*yj.
    # Winding sign w folded in and c moved to the compare threshold, so the
    # kernel tests:  (w*a)*px + (w*b)*py >= -(w*c)   <=>   inside.
    p0, p1, p2 = faces_xy[:, 0], faces_xy[:, 1], faces_xy[:, 2]

    def coeffs(pa, pb):
        a = pb[:, 1] - pa[:, 1]
        b = pa[:, 0] - pb[:, 0]
        c = pb[:, 0] * pa[:, 1] - pa[:, 0] * pb[:, 1]
        return a, b, c

    a0, b0, c0 = coeffs(p0, p1)
    a1, b1, c1 = coeffs(p1, p2)
    a2, b2, c2 = coeffs(p2, p0)

    # Interior sign = sign of edge-0 function evaluated at the opposite vertex
    # (= twice the signed projected area).
    s = a0 * p2[:, 0] + b0 * p2[:, 1] + c0
    w = jnp.where(s >= 0.0, 1.0, -1.0).astype(jnp.float32)

    coefs = jnp.stack([a0, b0, -c0, a1, b1, -c1, a2, b2, -c2], axis=1)  # (F, 9)
    coefs = coefs * w[:, None]   # a'=w*a, b'=w*b, t'=-(w*c)

    # Degenerate (edge-on) faces: make the inside test unsatisfiable
    # (0*px + 0*py >= 1 is always false).
    never = jnp.array([0.0, 0.0, 1.0] * 3, jnp.float32)
    valid = (jnp.abs(s) > DEGENERATE_EPS)[:, None]
    coefs = jnp.where(valid, coefs, never[None, :])
    return coefs.reshape(-1).astype(jnp.float32)                         # (F*9,)


def make_cube():
    # Deterministic stand-in for load_obj(filename_obj).
    verts = np.array(
        [[x, y, z] for x in (-0.5, 0.5) for y in (-0.5, 0.5) for z in (-0.5, 0.5)],
        dtype=np.float32,
    )  # index = 4*xi + 2*yi + zi
    faces = np.array(
        [
            [0, 1, 3], [0, 3, 2],   # -x
            [4, 6, 7], [4, 7, 5],   # +x
            [0, 4, 5], [0, 5, 1],   # -y
            [2, 3, 7], [2, 7, 6],   # +y
            [0, 2, 6], [0, 6, 4],   # -z
            [1, 5, 7], [1, 7, 3],   # +z
        ],
        dtype=np.int32,
    )
    return verts, faces


@jax.jit
def model_forward(vertices, faces, image_ref):
    # renderer.eye = get_points_from_angles(2.732, 0, 90)
    eye = get_points_from_angles(CAM_DISTANCE, CAM_ELEVATION, CAM_AZIMUTH)
    v_cam = look_at(vertices, eye)
    v_ndc = perspective(v_cam)
    faces_xy = v_ndc[faces][:, :, :2]            # (F, 3, 2) projected triangles
    coefs_flat = edge_coefficients(faces_xy)     # (F*9,) → SMEM

    # TODO(synk): neural_renderer's CUDA rasterizer applies sub-pixel
    # anti-aliasing to silhouette edges (and approximate gradients); here we
    # use hard per-pixel coverage.
    w_ld = (1.0 - 2.0 * image_ref).reshape(ROWS, LANES)   # lane-dense layout
    sum_ref_sq = jnp.sum(image_ref * image_ref)

    partial = pl.pallas_call(
        rasterize_loss_kernel,
        out_shape=jax.ShapeDtypeStruct((1, 1), jnp.float32),
        in_specs=[
            pl.BlockSpec(memory_space=pltpu.MemorySpace.SMEM),   # edge coefficients
            pl.BlockSpec(memory_space=pltpu.MemorySpace.VMEM),   # px plane
            pl.BlockSpec(memory_space=pltpu.MemorySpace.VMEM),   # py plane
            pl.BlockSpec(memory_space=pltpu.MemorySpace.VMEM),   # 1 - 2*image_ref
        ],
        out_specs=pl.BlockSpec(memory_space=pltpu.MemorySpace.VMEM),
    )(coefs_flat, PX_LD, PY_LD, w_ld)

    return partial[0, 0] + sum_ref_sq


if __name__ == "__main__":
    vertices_np, faces_np = make_cube()
    vertices = jnp.asarray(vertices_np)
    faces = jnp.asarray(faces_np)

    # Deterministic stand-in for imread(filename_ref).mean(-1)/255 (values in [0,1]).
    key = jax.random.PRNGKey(0)
    image_ref = jax.random.uniform(key, (H, W), dtype=jnp.float32)

    loss = model_forward(vertices, faces, image_ref)
    jax.block_until_ready(loss)
    assert loss.shape == () and loss.dtype == jnp.float32
    assert bool(jnp.isfinite(loss))
    print("KERNEL_OK")
</pallas_src>

<mosaic_0001>
module attributes {stable_mosaic.version = 11 : i64} {
  func.func @rasterize_loss_kernel(%arg0: memref<108xf32, #tpu.memory_space<smem>>, %arg1: memref<32x128xf32, #tpu.memory_space<vmem>>, %arg2: memref<32x128xf32, #tpu.memory_space<vmem>>, %arg3: memref<32x128xf32, #tpu.memory_space<vmem>>, %arg4: memref<1x1xf32, #tpu.memory_space<vmem>>) attributes {dimension_semantics = [], scalar_prefetch = 0 : i64, scratch_operands = 0 : i64, tpu.core_type = #tpu.core_type<tc>} {
    %c0 = arith.constant 0 : index
    %c0_0 = arith.constant 0 : index
    %0 = vector.load %arg1[%c0, %c0_0] : memref<32x128xf32, #tpu.memory_space<vmem>>, vector<32x128xf32>
    %c0_1 = arith.constant 0 : index
    %c0_2 = arith.constant 0 : index
    %1 = vector.load %arg2[%c0_1, %c0_2] : memref<32x128xf32, #tpu.memory_space<vmem>>, vector<32x128xf32>
    %false = arith.constant false
    %2 = vector.broadcast %false : i1 to vector<32x128xi1>
    %c0_3 = arith.constant 0 : index
    %3 = memref.load %arg0[%c0_3] : memref<108xf32, #tpu.memory_space<smem>>
    %4 = vector.broadcast %3 : f32 to vector<32x128xf32>
    %5 = arith.mulf %4, %0 : vector<32x128xf32>
    %c1 = arith.constant 1 : index
    %6 = memref.load %arg0[%c1] : memref<108xf32, #tpu.memory_space<smem>>
    %7 = vector.broadcast %6 : f32 to vector<32x128xf32>
    %8 = arith.mulf %7, %1 : vector<32x128xf32>
    %9 = arith.addf %5, %8 : vector<32x128xf32>
    %c2 = arith.constant 2 : index
    %10 = memref.load %arg0[%c2] : memref<108xf32, #tpu.memory_space<smem>>
    %11 = vector.broadcast %10 : f32 to vector<32x128xf32>
    %12 = arith.cmpf oge, %9, %11 : vector<32x128xf32>
    %c3 = arith.constant 3 : index
    %13 = memref.load %arg0[%c3] : memref<108xf32, #tpu.memory_space<smem>>
    %14 = vector.broadcast %13 : f32 to vector<32x128xf32>
    %15 = arith.mulf %14, %0 : vector<32x128xf32>
    %c4 = arith.constant 4 : index
    %16 = memref.load %arg0[%c4] : memref<108xf32, #tpu.memory_space<smem>>
    %17 = vector.broadcast %16 : f32 to vector<32x128xf32>
    %18 = arith.mulf %17, %1 : vector<32x128xf32>
    %19 = arith.addf %15, %18 : vector<32x128xf32>
    %c5 = arith.constant 5 : index
    %20 = memref.load %arg0[%c5] : memref<108xf32, #tpu.memory_space<smem>>
    %21 = vector.broadcast %20 : f32 to vector<32x128xf32>
    %22 = arith.cmpf oge, %19, %21 : vector<32x128xf32>
    %23 = arith.andi %12, %22 : vector<32x128xi1>
    %c6 = arith.constant 6 : index
    %24 = memref.load %arg0[%c6] : memref<108xf32, #tpu.memory_space<smem>>
    %25 = vector.broadcast %24 : f32 to vector<32x128xf32>
    %26 = arith.mulf %25, %0 : vector<32x128xf32>
    %c7 = arith.constant 7 : index
    %27 = memref.load %arg0[%c7] : memref<108xf32, #tpu.memory_space<smem>>
    %28 = vector.broadcast %27 : f32 to vector<32x128xf32>
    %29 = arith.mulf %28, %1 : vector<32x128xf32>
    %30 = arith.addf %26, %29 : vector<32x128xf32>
    %c8 = arith.constant 8 : index
    %31 = memref.load %arg0[%c8] : memref<108xf32, #tpu.memory_space<smem>>
    %32 = vector.broadcast %31 : f32 to vector<32x128xf32>
    %33 = arith.cmpf oge, %30, %32 : vector<32x128xf32>
    %34 = arith.andi %23, %33 : vector<32x128xi1>
    %35 = arith.ori %2, %34 : vector<32x128xi1>
    %c9 = arith.constant 9 : index
    %36 = memref.load %arg0[%c9] : memref<108xf32, #tpu.memory_space<smem>>
    %37 = vector.broadcast %36 : f32 to vector<32x128xf32>
    %38 = arith.mulf %37, %0 : vector<32x128xf32>
    %c10 = arith.constant 10 : index
    %39 = memref.load %arg0[%c10] : memref<108xf32, #tpu.memory_space<smem>>
    %40 = vector.broadcast %39 : f32 to vector<32x128xf32>
    %41 = arith.mulf %40, %1 : vector<32x128xf32>
    %42 = arith.addf %38, %41 : vector<32x128xf32>
    %c11 = arith.constant 11 : index
    %43 = memref.load %arg0[%c11] : memref<108xf32, #tpu.memory_space<smem>>
    %44 = vector.broadcast %43 : f32 to vector<32x128xf32>
    %45 = arith.cmpf oge, %42, %44 : vector<32x128xf32>
    %c12 = arith.constant 12 : index
    %46 = memref.load %arg0[%c12] : memref<108xf32, #tpu.memory_space<smem>>
    %47 = vector.broadcast %46 : f32 to vector<32x128xf32>
    %48 = arith.mulf %47, %0 : vector<32x128xf32>
    %c13 = arith.constant 13 : index
    %49 = memref.load %arg0[%c13] : memref<108xf32, #tpu.memory_space<smem>>
    %50 = vector.broadcast %49 : f32 to vector<32x128xf32>
    %51 = arith.mulf %50, %1 : vector<32x128xf32>
    %52 = arith.addf %48, %51 : vector<32x128xf32>
    %c14 = arith.constant 14 : index
    %53 = memref.load %arg0[%c14] : memref<108xf32, #tpu.memory_space<smem>>
    %54 = vector.broadcast %53 : f32 to vector<32x128xf32>
    %55 = arith.cmpf oge, %52, %54 : vector<32x128xf32>
    %56 = arith.andi %45, %55 : vector<32x128xi1>
    %c15 = arith.constant 15 : index
    %57 = memref.load %arg0[%c15] : memref<108xf32, #tpu.memory_space<smem>>
    %58 = vector.broadcast %57 : f32 to vector<32x128xf32>
    %59 = arith.mulf %58, %0 : vector<32x128xf32>
    %c16 = arith.constant 16 : index
    %60 = memref.load %arg0[%c16] : memref<108xf32, #tpu.memory_space<smem>>
    %61 = vector.broadcast %60 : f32 to vector<32x128xf32>
    %62 = arith.mulf %61, %1 : vector<32x128xf32>
    %63 = arith.addf %59, %62 : vector<32x128xf32>
    %c17 = arith.constant 17 : index
    %64 = memref.load %arg0[%c17] : memref<108xf32, #tpu.memory_space<smem>>
    %65 = vector.broadcast %64 : f32 to vector<32x128xf32>
    %66 = arith.cmpf oge, %63, %65 : vector<32x128xf32>
    %67 = arith.andi %56, %66 : vector<32x128xi1>
    %68 = arith.ori %35, %67 : vector<32x128xi1>
    %c18 = arith.constant 18 : index
    %69 = memref.load %arg0[%c18] : memref<108xf32, #tpu.memory_space<smem>>
    %70 = vector.broadcast %69 : f32 to vector<32x128xf32>
    %71 = arith.mulf %70, %0 : vector<32x128xf32>
    %c19 = arith.constant 19 : index
    %72 = memref.load %arg0[%c19] : memref<108xf32, #tpu.memory_space<smem>>
    %73 = vector.broadcast %72 : f32 to vector<32x128xf32>
    %74 = arith.mulf %73, %1 : vector<32x128xf32>
    %75 = arith.addf %71, %74 : vector<32x128xf32>
    %c20 = arith.constant 20 : index
    %76 = memref.load %arg0[%c20] : memref<108xf32, #tpu.memory_space<smem>>
    %77 = vector.broadcast %76 : f32 to vector<32x128xf32>
    %78 = arith.cmpf oge, %75, %77 : vector<32x128xf32>
    %c21 = arith.constant 21 : index
    %79 = memref.load %arg0[%c21] : memref<108xf32, #tpu.memory_space<smem>>
    %80 = vector.broadcast %79 : f32 to vector<32x128xf32>
    %81 = arith.mulf %80, %0 : vector<32x128xf32>
    %c22 = arith.constant 22 : index
    %82 = memref.load %arg0[%c22] : memref<108xf32, #tpu.memory_space<smem>>
    %83 = vector.broadcast %82 : f32 to vector<32x128xf32>
    %84 = arith.mulf %83, %1 : vector<32x128xf32>
    %85 = arith.addf %81, %84 : vector<32x128xf32>
    %c23 = arith.constant 23 : index
    %86 = memref.load %arg0[%c23] : memref<108xf32, #tpu.memory_space<smem>>
    %87 = vector.broadcast %86 : f32 to vector<32x128xf32>
    %88 = arith.cmpf oge, %85, %87 : vector<32x128xf32>
    %89 = arith.andi %78, %88 : vector<32x128xi1>
    %c24 = arith.constant 24 : index
    %90 = memref.load %arg0[%c24] : memref<108xf32, #tpu.memory_space<smem>>
    %91 = vector.broadcast %90 : f32 to vector<32x128xf32>
    %92 = arith.mulf %91, %0 : vector<32x128xf32>
    %c25 = arith.constant 25 : index
    %93 = memref.load %arg0[%c25] : memref<108xf32, #tpu.memory_space<smem>>
    %94 = vector.broadcast %93 : f32 to vector<32x128xf32>
    %95 = arith.mulf %94, %1 : vector<32x128xf32>
    %96 = arith.addf %92, %95 : vector<32x128xf32>
    %c26 = arith.constant 26 : index
    %97 = memref.load %arg0[%c26] : memref<108xf32, #tpu.memory_space<smem>>
    %98 = vector.broadcast %97 : f32 to vector<32x128xf32>
    %99 = arith.cmpf oge, %96, %98 : vector<32x128xf32>
    %100 = arith.andi %89, %99 : vector<32x128xi1>
    %101 = arith.ori %68, %100 : vector<32x128xi1>
    %c27 = arith.constant 27 : index
    %102 = memref.load %arg0[%c27] : memref<108xf32, #tpu.memory_space<smem>>
    %103 = vector.broadcast %102 : f32 to vector<32x128xf32>
    %104 = arith.mulf %103, %0 : vector<32x128xf32>
    %c28 = arith.constant 28 : index
    %105 = memref.load %arg0[%c28] : memref<108xf32, #tpu.memory_space<smem>>
    %106 = vector.broadcast %105 : f32 to vector<32x128xf32>
    %107 = arith.mulf %106, %1 : vector<32x128xf32>
    %108 = arith.addf %104, %107 : vector<32x128xf32>
    %c29 = arith.constant 29 : index
    %109 = memref.load %arg0[%c29] : memref<108xf32, #tpu.memory_space<smem>>
    %110 = vector.broadcast %109 : f32 to vector<32x128xf32>
    %111 = arith.cmpf oge, %108, %110 : vector<32x128xf32>
    %c30 = arith.constant 30 : index
    %112 = memref.load %arg0[%c30] : memref<108xf32, #tpu.memory_space<smem>>
    %113 = vector.broadcast %112 : f32 to vector<32x128xf32>
    %114 = arith.mulf %113, %0 : vector<32x128xf32>
    %c31 = arith.constant 31 : index
    %115 = memref.load %arg0[%c31] : memref<108xf32, #tpu.memory_space<smem>>
    %116 = vector.broadcast %115 : f32 to vector<32x128xf32>
    %117 = arith.mulf %116, %1 : vector<32x128xf32>
    %118 = arith.addf %114, %117 : vector<32x128xf32>
    %c32 = arith.constant 32 : index
    %119 = memref.load %arg0[%c32] : memref<108xf32, #tpu.memory_space<smem>>
    %120 = vector.broadcast %119 : f32 to vector<32x128xf32>
    %121 = arith.cmpf oge, %118, %120 : vector<32x128xf32>
    %122 = arith.andi %111, %121 : vector<32x128xi1>
    %c33 = arith.constant 33 : index
    %123 = memref.load %arg0[%c33] : memref<108xf32, #tpu.memory_space<smem>>
    %124 = vector.broadcast %123 : f32 to vector<32x128xf32>
    %125 = arith.mulf %124, %0 : vector<32x128xf32>
    %c34 = arith.constant 34 : index
    %126 = memref.load %arg0[%c34] : memref<108xf32, #tpu.memory_space<smem>>
    %127 = vector.broadcast %126 : f32 to vector<32x128xf32>
    %128 = arith.mulf %127, %1 : vector<32x128xf32>
    %129 = arith.addf %125, %128 : vector<32x128xf32>
    %c35 = arith.constant 35 : index
    %130 = memref.load %arg0[%c35] : memref<108xf32, #tpu.memory_space<smem>>
    %131 = vector.broadcast %130 : f32 to vector<32x128xf32>
    %132 = arith.cmpf oge, %129, %131 : vector<32x128xf32>
    %133 = arith.andi %122, %132 : vector<32x128xi1>
    %134 = arith.ori %101, %133 : vector<32x128xi1>
    %c36 = arith.constant 36 : index
    %135 = memref.load %arg0[%c36] : memref<108xf32, #tpu.memory_space<smem>>
    %136 = vector.broadcast %135 : f32 to vector<32x128xf32>
    %137 = arith.mulf %136, %0 : vector<32x128xf32>
    %c37 = arith.constant 37 : index
    %138 = memref.load %arg0[%c37] : memref<108xf32, #tpu.memory_space<smem>>
    %139 = vector.broadcast %138 : f32 to vector<32x128xf32>
    %140 = arith.mulf %139, %1 : vector<32x128xf32>
    %141 = arith.addf %137, %140 : vector<32x128xf32>
    %c38 = arith.constant 38 : index
    %142 = memref.load %arg0[%c38] : memref<108xf32, #tpu.memory_space<smem>>
    %143 = vector.broadcast %142 : f32 to vector<32x128xf32>
    %144 = arith.cmpf oge, %141, %143 : vector<32x128xf32>
    %c39 = arith.constant 39 : index
    %145 = memref.load %arg0[%c39] : memref<108xf32, #tpu.memory_space<smem>>
    %146 = vector.broadcast %145 : f32 to vector<32x128xf32>
    %147 = arith.mulf %146, %0 : vector<32x128xf32>
    %c40 = arith.constant 40 : index
    %148 = memref.load %arg0[%c40] : memref<108xf32, #tpu.memory_space<smem>>
    %149 = vector.broadcast %148 : f32 to vector<32x128xf32>
    %150 = arith.mulf %149, %1 : vector<32x128xf32>
    %151 = arith.addf %147, %150 : vector<32x128xf32>
    %c41 = arith.constant 41 : index
    %152 = memref.load %arg0[%c41] : memref<108xf32, #tpu.memory_space<smem>>
    %153 = vector.broadcast %152 : f32 to vector<32x128xf32>
    %154 = arith.cmpf oge, %151, %153 : vector<32x128xf32>
    %155 = arith.andi %144, %154 : vector<32x128xi1>
    %c42 = arith.constant 42 : index
    %156 = memref.load %arg0[%c42] : memref<108xf32, #tpu.memory_space<smem>>
    %157 = vector.broadcast %156 : f32 to vector<32x128xf32>
    %158 = arith.mulf %157, %0 : vector<32x128xf32>
    %c43 = arith.constant 43 : index
    %159 = memref.load %arg0[%c43] : memref<108xf32, #tpu.memory_space<smem>>
    %160 = vector.broadcast %159 : f32 to vector<32x128xf32>
    %161 = arith.mulf %160, %1 : vector<32x128xf32>
    %162 = arith.addf %158, %161 : vector<32x128xf32>
    %c44 = arith.constant 44 : index
    %163 = memref.load %arg0[%c44] : memref<108xf32, #tpu.memory_space<smem>>
    %164 = vector.broadcast %163 : f32 to vector<32x128xf32>
    %165 = arith.cmpf oge, %162, %164 : vector<32x128xf32>
    %166 = arith.andi %155, %165 : vector<32x128xi1>
    %167 = arith.ori %134, %166 : vector<32x128xi1>
    %c45 = arith.constant 45 : index
    %168 = memref.load %arg0[%c45] : memref<108xf32, #tpu.memory_space<smem>>
    %169 = vector.broadcast %168 : f32 to vector<32x128xf32>
    %170 = arith.mulf %169, %0 : vector<32x128xf32>
    %c46 = arith.constant 46 : index
    %171 = memref.load %arg0[%c46] : memref<108xf32, #tpu.memory_space<smem>>
    %172 = vector.broadcast %171 : f32 to vector<32x128xf32>
    %173 = arith.mulf %172, %1 : vector<32x128xf32>
    %174 = arith.addf %170, %173 : vector<32x128xf32>
    %c47 = arith.constant 47 : index
    %175 = memref.load %arg0[%c47] : memref<108xf32, #tpu.memory_space<smem>>
    %176 = vector.broadcast %175 : f32 to vector<32x128xf32>
    %177 = arith.cmpf oge, %174, %176 : vector<32x128xf32>
    %c48 = arith.constant 48 : index
    %178 = memref.load %arg0[%c48] : memref<108xf32, #tpu.memory_space<smem>>
    %179 = vector.broadcast %178 : f32 to vector<32x128xf32>
    %180 = arith.mulf %179, %0 : vector<32x128xf32>
    %c49 = arith.constant 49 : index
    %181 = memref.load %arg0[%c49] : memref<108xf32, #tpu.memory_space<smem>>
    %182 = vector.broadcast %181 : f32 to vector<32x128xf32>
    %183 = arith.mulf %182, %1 : vector<32x128xf32>
    %184 = arith.addf %180, %183 : vector<32x128xf32>
    %c50 = arith.constant 50 : index
    %185 = memref.load %arg0[%c50] : memref<108xf32, #tpu.memory_space<smem>>
    %186 = vector.broadcast %185 : f32 to vector<32x128xf32>
    %187 = arith.cmpf oge, %184, %186 : vector<32x128xf32>
    %188 = arith.andi %177, %187 : vector<32x128xi1>
    %c51 = arith.constant 51 : index
    %189 = memref.load %arg0[%c51] : memref<108xf32, #tpu.memory_space<smem>>
    %190 = vector.broadcast %189 : f32 to vector<32x128xf32>
    %191 = arith.mulf %190, %0 : vector<32x128xf32>
    %c52 = arith.constant 52 : index
    %192 = memref.load %arg0[%c52] : memref<108xf32, #tpu.memory_space<smem>>
    %193 = vector.broadcast %192 : f32 to vector<32x128xf32>
    %194 = arith.mulf %193, %1 : vector<32x128xf32>
    %195 = arith.addf %191, %194 : vector<32x128xf32>
    %c53 = arith.constant 53 : index
    %196 = memref.load %arg0[%c53] : memref<108xf32, #tpu.memory_space<smem>>
    %197 = vector.broadcast %196 : f32 to vector<32x128xf32>
    %198 = arith.cmpf oge, %195, %197 : vector<32x128xf32>
    %199 = arith.andi %188, %198 : vector<32x128xi1>
    %200 = arith.ori %167, %199 : vector<32x128xi1>
    %c54 = arith.constant 54 : index
    %201 = memref.load %arg0[%c54] : memref<108xf32, #tpu.memory_space<smem>>
    %202 = vector.broadcast %201 : f32 to vector<32x128xf32>
    %203 = arith.mulf %202, %0 : vector<32x128xf32>
    %c55 = arith.constant 55 : index
    %204 = memref.load %arg0[%c55] : memref<108xf32, #tpu.memory_space<smem>>
    %205 = vector.broadcast %204 : f32 to vector<32x128xf32>
    %206 = arith.mulf %205, %1 : vector<32x128xf32>
    %207 = arith.addf %203, %206 : vector<32x128xf32>
    %c56 = arith.constant 56 : index
    %208 = memref.load %arg0[%c56] : memref<108xf32, #tpu.memory_space<smem>>
    %209 = vector.broadcast %208 : f32 to vector<32x128xf32>
    %210 = arith.cmpf oge, %207, %209 : vector<32x128xf32>
    %c57 = arith.constant 57 : index
    %211 = memref.load %arg0[%c57] : memref<108xf32, #tpu.memory_space<smem>>
    %212 = vector.broadcast %211 : f32 to vector<32x128xf32>
    %213 = arith.mulf %212, %0 : vector<32x128xf32>
    %c58 = arith.constant 58 : index
    %214 = memref.load %arg0[%c58] : memref<108xf32, #tpu.memory_space<smem>>
    %215 = vector.broadcast %214 : f32 to vector<32x128xf32>
    %216 = arith.mulf %215, %1 : vector<32x128xf32>
    %217 = arith.addf %213, %216 : vector<32x128xf32>
    %c59 = arith.constant 59 : index
    %218 = memref.load %arg0[%c59] : memref<108xf32, #tpu.memory_space<smem>>
    %219 = vector.broadcast %218 : f32 to vector<32x128xf32>
    %220 = arith.cmpf oge, %217, %219 : vector<32x128xf32>
    %221 = arith.andi %210, %220 : vector<32x128xi1>
    %c60 = arith.constant 60 : index
    %222 = memref.load %arg0[%c60] : memref<108xf32, #tpu.memory_space<smem>>
    %223 = vector.broadcast %222 : f32 to vector<32x128xf32>
    %224 = arith.mulf %223, %0 : vector<32x128xf32>
    %c61 = arith.constant 61 : index
    %225 = memref.load %arg0[%c61] : memref<108xf32, #tpu.memory_space<smem>>
    %226 = vector.broadcast %225 : f32 to vector<32x128xf32>
    %227 = arith.mulf %226, %1 : vector<32x128xf32>
    %228 = arith.addf %224, %227 : vector<32x128xf32>
    %c62 = arith.constant 62 : index
    %229 = memref.load %arg0[%c62] : memref<108xf32, #tpu.memory_space<smem>>
    %230 = vector.broadcast %229 : f32 to vector<32x128xf32>
    %231 = arith.cmpf oge, %228, %230 : vector<32x128xf32>
    %232 = arith.andi %221, %231 : vector<32x128xi1>
    %233 = arith.ori %200, %232 : vector<32x128xi1>
    %c63 = arith.constant 63 : index
    %234 = memref.load %arg0[%c63] : memref<108xf32, #tpu.memory_space<smem>>
    %235 = vector.broadcast %234 : f32 to vector<32x128xf32>
    %236 = arith.mulf %235, %0 : vector<32x128xf32>
    %c64 = arith.constant 64 : index
    %237 = memref.load %arg0[%c64] : memref<108xf32, #tpu.memory_space<smem>>
    %238 = vector.broadcast %237 : f32 to vector<32x128xf32>
    %239 = arith.mulf %238, %1 : vector<32x128xf32>
    %240 = arith.addf %236, %239 : vector<32x128xf32>
    %c65 = arith.constant 65 : index
    %241 = memref.load %arg0[%c65] : memref<108xf32, #tpu.memory_space<smem>>
    %242 = vector.broadcast %241 : f32 to vector<32x128xf32>
    %243 = arith.cmpf oge, %240, %242 : vector<32x128xf32>
    %c66 = arith.constant 66 : index
    %244 = memref.load %arg0[%c66] : memref<108xf32, #tpu.memory_space<smem>>
    %245 = vector.broadcast %244 : f32 to vector<32x128xf32>
    %246 = arith.mulf %245, %0 : vector<32x128xf32>
    %c67 = arith.constant 67 : index
    %247 = memref.load %arg0[%c67] : memref<108xf32, #tpu.memory_space<smem>>
    %248 = vector.broadcast %247 : f32 to vector<32x128xf32>
    %249 = arith.mulf %248, %1 : vector<32x128xf32>
    %250 = arith.addf %246, %249 : vector<32x128xf32>
    %c68 = arith.constant 68 : index
    %251 = memref.load %arg0[%c68] : memref<108xf32, #tpu.memory_space<smem>>
    %252 = vector.broadcast %251 : f32 to vector<32x128xf32>
    %253 = arith.cmpf oge, %250, %252 : vector<32x128xf32>
    %254 = arith.andi %243, %253 : vector<32x128xi1>
    %c69 = arith.constant 69 : index
    %255 = memref.load %arg0[%c69] : memref<108xf32, #tpu.memory_space<smem>>
    %256 = vector.broadcast %255 : f32 to vector<32x128xf32>
    %257 = arith.mulf %256, %0 : vector<32x128xf32>
    %c70 = arith.constant 70 : index
    %258 = memref.load %arg0[%c70] : memref<108xf32, #tpu.memory_space<smem>>
    %259 = vector.broadcast %258 : f32 to vector<32x128xf32>
    %260 = arith.mulf %259, %1 : vector<32x128xf32>
    %261 = arith.addf %257, %260 : vector<32x128xf32>
    %c71 = arith.constant 71 : index
    %262 = memref.load %arg0[%c71] : memref<108xf32, #tpu.memory_space<smem>>
    %263 = vector.broadcast %262 : f32 to vector<32x128xf32>
    %264 = arith.cmpf oge, %261, %263 : vector<32x128xf32>
    %265 = arith.andi %254, %264 : vector<32x128xi1>
    %266 = arith.ori %233, %265 : vector<32x128xi1>
    %c72 = arith.constant 72 : index
    %267 = memref.load %arg0[%c72] : memref<108xf32, #tpu.memory_space<smem>>
    %268 = vector.broadcast %267 : f32 to vector<32x128xf32>
    %269 = arith.mulf %268, %0 : vector<32x128xf32>
    %c73 = arith.constant 73 : index
    %270 = memref.load %arg0[%c73] : memref<108xf32, #tpu.memory_space<smem>>
    %271 = vector.broadcast %270 : f32 to vector<32x128xf32>
    %272 = arith.mulf %271, %1 : vector<32x128xf32>
    %273 = arith.addf %269, %272 : vector<32x128xf32>
    %c74 = arith.constant 74 : index
    %274 = memref.load %arg0[%c74] : memref<108xf32, #tpu.memory_space<smem>>
    %275 = vector.broadcast %274 : f32 to vector<32x128xf32>
    %276 = arith.cmpf oge, %273, %275 : vector<32x128xf32>
    %c75 = arith.constant 75 : index
    %277 = memref.load %arg0[%c75] : memref<108xf32, #tpu.memory_space<smem>>
    %278 = vector.broadcast %277 : f32 to vector<32x128xf32>
    %279 = arith.mulf %278, %0 : vector<32x128xf32>
    %c76 = arith.constant 76 : index
    %280 = memref.load %arg0[%c76] : memref<108xf32, #tpu.memory_space<smem>>
    %281 = vector.broadcast %280 : f32 to vector<32x128xf32>
    %282 = arith.mulf %281, %1 : vector<32x128xf32>
    %283 = arith.addf %279, %282 : vector<32x128xf32>
    %c77 = arith.constant 77 : index
    %284 = memref.load %arg0[%c77] : memref<108xf32, #tpu.memory_space<smem>>
    %285 = vector.broadcast %284 : f32 to vector<32x128xf32>
    %286 = arith.cmpf oge, %283, %285 : vector<32x128xf32>
    %287 = arith.andi %276, %286 : vector<32x128xi1>
    %c78 = arith.constant 78 : index
    %288 = memref.load %arg0[%c78] : memref<108xf32, #tpu.memory_space<smem>>
    %289 = vector.broadcast %288 : f32 to vector<32x128xf32>
    %290 = arith.mulf %289, %0 : vector<32x128xf32>
    %c79 = arith.constant 79 : index
    %291 = memref.load %arg0[%c79] : memref<108xf32, #tpu.memory_space<smem>>
    %292 = vector.broadcast %291 : f32 to vector<32x128xf32>
    %293 = arith.mulf %292, %1 : vector<32x128xf32>
    %294 = arith.addf %290, %293 : vector<32x128xf32>
    %c80 = arith.constant 80 : index
    %295 = memref.load %arg0[%c80] : memref<108xf32, #tpu.memory_space<smem>>
    %296 = vector.broadcast %295 : f32 to vector<32x128xf32>
    %297 = arith.cmpf oge, %294, %296 : vector<32x128xf32>
    %298 = arith.andi %287, %297 : vector<32x128xi1>
    %299 = arith.ori %266, %298 : vector<32x128xi1>
    %c81 = arith.constant 81 : index
    %300 = memref.load %arg0[%c81] : memref<108xf32, #tpu.memory_space<smem>>
    %301 = vector.broadcast %300 : f32 to vector<32x128xf32>
    %302 = arith.mulf %301, %0 : vector<32x128xf32>
    %c82 = arith.constant 82 : index
    %303 = memref.load %arg0[%c82] : memref<108xf32, #tpu.memory_space<smem>>
    %304 = vector.broadcast %303 : f32 to vector<32x128xf32>
    %305 = arith.mulf %304, %1 : vector<32x128xf32>
    %306 = arith.addf %302, %305 : vector<32x128xf32>
    %c83 = arith.constant 83 : index
    %307 = memref.load %arg0[%c83] : memref<108xf32, #tpu.memory_space<smem>>
    %308 = vector.broadcast %307 : f32 to vector<32x128xf32>
    %309 = arith.cmpf oge, %306, %308 : vector<32x128xf32>
    %c84 = arith.constant 84 : index
    %310 = memref.load %arg0[%c84] : memref<108xf32, #tpu.memory_space<smem>>
    %311 = vector.broadcast %310 : f32 to vector<32x128xf32>
    %312 = arith.mulf %311, %0 : vector<32x128xf32>
    %c85 = arith.constant 85 : index
    %313 = memref.load %arg0[%c85] : memref<108xf32, #tpu.memory_space<smem>>
    %314 = vector.broadcast %313 : f32 to vector<32x128xf32>
    %315 = arith.mulf %314, %1 : vector<32x128xf32>
    %316 = arith.addf %312, %315 : vector<32x128xf32>
    %c86 = arith.constant 86 : index
    %317 = memref.load %arg0[%c86] : memref<108xf32, #tpu.memory_space<smem>>
    %318 = vector.broadcast %317 : f32 to vector<32x128xf32>
    %319 = arith.cmpf oge, %316, %318 : vector<32x128xf32>
    %320 = arith.andi %309, %319 : vector<32x128xi1>
    %c87 = arith.constant 87 : index
    %321 = memref.load %arg0[%c87] : memref<108xf32, #tpu.memory_space<smem>>
    %322 = vector.broadcast %321 : f32 to vector<32x128xf32>
    %323 = arith.mulf %322, %0 : vector<32x128xf32>
    %c88 = arith.constant 88 : index
    %324 = memref.load %arg0[%c88] : memref<108xf32, #tpu.memory_space<smem>>
    %325 = vector.broadcast %324 : f32 to vector<32x128xf32>
    %326 = arith.mulf %325, %1 : vector<32x128xf32>
    %327 = arith.addf %323, %326 : vector<32x128xf32>
    %c89 = arith.constant 89 : index
    %328 = memref.load %arg0[%c89] : memref<108xf32, #tpu.memory_space<smem>>
    %329 = vector.broadcast %328 : f32 to vector<32x128xf32>
    %330 = arith.cmpf oge, %327, %329 : vector<32x128xf32>
    %331 = arith.andi %320, %330 : vector<32x128xi1>
    %332 = arith.ori %299, %331 : vector<32x128xi1>
    %c90 = arith.constant 90 : index
    %333 = memref.load %arg0[%c90] : memref<108xf32, #tpu.memory_space<smem>>
    %334 = vector.broadcast %333 : f32 to vector<32x128xf32>
    %335 = arith.mulf %334, %0 : vector<32x128xf32>
    %c91 = arith.constant 91 : index
    %336 = memref.load %arg0[%c91] : memref<108xf32, #tpu.memory_space<smem>>
    %337 = vector.broadcast %336 : f32 to vector<32x128xf32>
    %338 = arith.mulf %337, %1 : vector<32x128xf32>
    %339 = arith.addf %335, %338 : vector<32x128xf32>
    %c92 = arith.constant 92 : index
    %340 = memref.load %arg0[%c92] : memref<108xf32, #tpu.memory_space<smem>>
    %341 = vector.broadcast %340 : f32 to vector<32x128xf32>
    %342 = arith.cmpf oge, %339, %341 : vector<32x128xf32>
    %c93 = arith.constant 93 : index
    %343 = memref.load %arg0[%c93] : memref<108xf32, #tpu.memory_space<smem>>
    %344 = vector.broadcast %343 : f32 to vector<32x128xf32>
    %345 = arith.mulf %344, %0 : vector<32x128xf32>
    %c94 = arith.constant 94 : index
    %346 = memref.load %arg0[%c94] : memref<108xf32, #tpu.memory_space<smem>>
    %347 = vector.broadcast %346 : f32 to vector<32x128xf32>
    %348 = arith.mulf %347, %1 : vector<32x128xf32>
    %349 = arith.addf %345, %348 : vector<32x128xf32>
    %c95 = arith.constant 95 : index
    %350 = memref.load %arg0[%c95] : memref<108xf32, #tpu.memory_space<smem>>
    %351 = vector.broadcast %350 : f32 to vector<32x128xf32>
    %352 = arith.cmpf oge, %349, %351 : vector<32x128xf32>
    %353 = arith.andi %342, %352 : vector<32x128xi1>
    %c96 = arith.constant 96 : index
    %354 = memref.load %arg0[%c96] : memref<108xf32, #tpu.memory_space<smem>>
    %355 = vector.broadcast %354 : f32 to vector<32x128xf32>
    %356 = arith.mulf %355, %0 : vector<32x128xf32>
    %c97 = arith.constant 97 : index
    %357 = memref.load %arg0[%c97] : memref<108xf32, #tpu.memory_space<smem>>
    %358 = vector.broadcast %357 : f32 to vector<32x128xf32>
    %359 = arith.mulf %358, %1 : vector<32x128xf32>
    %360 = arith.addf %356, %359 : vector<32x128xf32>
    %c98 = arith.constant 98 : index
    %361 = memref.load %arg0[%c98] : memref<108xf32, #tpu.memory_space<smem>>
    %362 = vector.broadcast %361 : f32 to vector<32x128xf32>
    %363 = arith.cmpf oge, %360, %362 : vector<32x128xf32>
    %364 = arith.andi %353, %363 : vector<32x128xi1>
    %365 = arith.ori %332, %364 : vector<32x128xi1>
    %c99 = arith.constant 99 : index
    %366 = memref.load %arg0[%c99] : memref<108xf32, #tpu.memory_space<smem>>
    %367 = vector.broadcast %366 : f32 to vector<32x128xf32>
    %368 = arith.mulf %367, %0 : vector<32x128xf32>
    %c100 = arith.constant 100 : index
    %369 = memref.load %arg0[%c100] : memref<108xf32, #tpu.memory_space<smem>>
    %370 = vector.broadcast %369 : f32 to vector<32x128xf32>
    %371 = arith.mulf %370, %1 : vector<32x128xf32>
    %372 = arith.addf %368, %371 : vector<32x128xf32>
    %c101 = arith.constant 101 : index
    %373 = memref.load %arg0[%c101] : memref<108xf32, #tpu.memory_space<smem>>
    %374 = vector.broadcast %373 : f32 to vector<32x128xf32>
    %375 = arith.cmpf oge, %372, %374 : vector<32x128xf32>
    %c102 = arith.constant 102 : index
    %376 = memref.load %arg0[%c102] : memref<108xf32, #tpu.memory_space<smem>>
    %377 = vector.broadcast %376 : f32 to vector<32x128xf32>
    %378 = arith.mulf %377, %0 : vector<32x128xf32>
    %c103 = arith.constant 103 : index
    %379 = memref.load %arg0[%c103] : memref<108xf32, #tpu.memory_space<smem>>
    %380 = vector.broadcast %379 : f32 to vector<32x128xf32>
    %381 = arith.mulf %380, %1 : vector<32x128xf32>
    %382 = arith.addf %378, %381 : vector<32x128xf32>
    %c104 = arith.constant 104 : index
    %383 = memref.load %arg0[%c104] : memref<108xf32, #tpu.memory_space<smem>>
    %384 = vector.broadcast %383 : f32 to vector<32x128xf32>
    %385 = arith.cmpf oge, %382, %384 : vector<32x128xf32>
    %386 = arith.andi %375, %385 : vector<32x128xi1>
    %c105 = arith.constant 105 : index
    %387 = memref.load %arg0[%c105] : memref<108xf32, #tpu.memory_space<smem>>
    %388 = vector.broadcast %387 : f32 to vector<32x128xf32>
    %389 = arith.mulf %388, %0 : vector<32x128xf32>
    %c106 = arith.constant 106 : index
    %390 = memref.load %arg0[%c106] : memref<108xf32, #tpu.memory_space<smem>>
    %391 = vector.broadcast %390 : f32 to vector<32x128xf32>
    %392 = arith.mulf %391, %1 : vector<32x128xf32>
    %393 = arith.addf %389, %392 : vector<32x128xf32>
    %c107 = arith.constant 107 : index
    %394 = memref.load %arg0[%c107] : memref<108xf32, #tpu.memory_space<smem>>
    %395 = vector.broadcast %394 : f32 to vector<32x128xf32>
    %396 = arith.cmpf oge, %393, %395 : vector<32x128xf32>
    %397 = arith.andi %386, %396 : vector<32x128xi1>
    %398 = arith.ori %365, %397 : vector<32x128xi1>
    %c0_4 = arith.constant 0 : index
    %c0_5 = arith.constant 0 : index
    %399 = vector.load %arg3[%c0_4, %c0_5] : memref<32x128xf32, #tpu.memory_space<vmem>>, vector<32x128xf32>
    %cst = arith.constant 0.000000e+00 : f32
    %400 = vector.broadcast %cst : f32 to vector<32x128xf32>
    %401 = arith.select %398, %399, %400 : vector<32x128xi1>, vector<32x128xf32>
    %402 = vector.shape_cast %401 : vector<32x128xf32> to vector<1x32x128xf32>
    %cst_6 = arith.constant dense<0.000000e+00> : vector<1xf32>
    %403 = vector.multi_reduction <add>, %402, %cst_6 [1, 2] : vector<1x32x128xf32> to vector<1xf32>
    %404 = vector.shape_cast %403 : vector<1xf32> to vector<1x1x1xf32>
    %405 = vector.extract %404[0, 0, 0] : f32 from vector<1x1x1xf32>
    %406 = vector.broadcast %405 : f32 to vector<1x1xf32>
    %c0_7 = arith.constant 0 : index
    %c0_8 = arith.constant 0 : index
    %407 = vector.load %arg4[%c0_7, %c0_8] : memref<1x1xf32, #tpu.memory_space<vmem>>, vector<1x1xf32>
    tpu.vector_store %arg4[%c0_7, %c0_8], %406 {strides = array<i32>} : memref<1x1xf32, #tpu.memory_space<vmem>>, vector<1x1xf32>,
    return
  }
}

</mosaic_0001>

<llo_original>
// kernel: neg.0
$region0: #{neg.0}
  #allocation0 [shape = 's32[1]{0}', space=sflag, size = 0x4, scoped, tag = 'scoped memory for neg.0']
  %s0 = inlined_call_operand.vmem [shape: f32[12,1], index: 0, kind: input, shape index: {}]
  %s1 = inlined_call_operand.vmem [shape: f32[12,1], index: 1, kind: output, shape index: {}]
  %v2 = vld [vmem:[%s0] sm:$0x1]
  %3 = xla_tuple %v2
  %4 = xla_tuple %3
  %v5 = vxor.u32 %v2, 2147483648
  %6 = xla_tuple %v5
  %7 = vst [vmem:[%s1] sm:$0x1] %v5

// kernel: model_forward.1
$region0: #{model_forward.1}
  #allocation0 [shape = 'u32[]', space=smem, size = 0x4, offset = 0x4, fixed_abs, tag = 'smem constant byte address 0x4 - core index']
  #allocation1 [shape = 'u32[144,128]{1,0:T(1,128)}', space=vmem, size = 0x12000, scoped, tag = 'internal scratch']
  %s0 = inlined_call_operand.vmem [shape: f32[108], index: 0, kind: input, shape index: {}]
  %s1 = inlined_call_operand.vmem [shape: f32[32,128], index: 1, kind: input, shape index: {}]
  %s2 = inlined_call_operand.vmem [shape: f32[32,128], index: 2, kind: input, shape index: {}]
  %s3 = inlined_call_operand.vmem [shape: f32[32,128], index: 3, kind: input, shape index: {}]
  %s4 = inlined_call_operand.hbm [shape: f32[1,1], index: 4, kind: output, shape index: {}]
  %s5 = sld [smem:[#allocation0]]
  $region30: #{model_forward.1} parent=0
    _
  %s7 = ssub.s32 1, %s5
  %s8 = scalar_select 0, %s7, %s5
  $region1: #{model_forward.1} parent=0
    #allocation2 [shape = 'u8[512]{0}', space=smem, size = 0x200, scoped, tag = 'input window, operand 0, single buffered']
    #allocation3 [shape = 's32[1]{0}', space=sflag, size = 0x4, scoped, tag = 'scoped memory for model_forward.1']
    #allocation4 [shape = 's32[1]{0}', space=sflag, size = 0x4, scoped, tag = 'scoped memory for model_forward.1']
    #allocation5 [shape = 'u8[512]{0}', space=vmem, size = 0x400, scoped, tag = 'output window, operand 0, single buffered']
    %9 = vsyncpa [#allocation4], 0
    %10 = vsyncpa [#allocation3], 0
    // Predicated region
    $region2: #{model_forward.1} parent=1 // pred_check
      _
    $region3: #{model_forward.1} parent=1 // pred_check_branch
      %12 = sbr.rel (0) target = $region5
    $region4: #{model_forward.1} parent=1 // pred_region
      %s14 = ssub.s32 16, 16
      %15 = vsyncadd [#allocation4], %s14
      %s17 = sshll.u32 %s0, 4
      %s18 = int_to_ptr.vmem [resolvable:$true] %s17
      %20 = dma.vmem_to_smem %s18, 16, [#allocation2], [#allocation4]
    $region5: #{model_forward.1} parent=1 // pred_fallthru
      _
    // Predicated region
    $region6: #{model_forward.1} parent=1 // pred_check
      _
    $region7: #{model_forward.1} parent=1 // pred_check_branch
      %22 = sbr.rel (0) target = $region9
    $region8: #{model_forward.1} parent=1 // pred_region
      _
    $region9: #{model_forward.1} parent=1 // pred_fallthru
      _
    // Predicated region
    $region10: #{model_forward.1} parent=1 // pred_check
      _
    $region11: #{model_forward.1} parent=1 // pred_check_branch
      %24 = sbr.rel (0) target = $region13
    $region12: #{model_forward.1} parent=1 // pred_region
      _
    $region13: #{model_forward.1} parent=1 // pred_fallthru
      _
    // Predicated region
    $region14: #{model_forward.1} parent=1 // pred_check
      _
    $region15: #{model_forward.1} parent=1 // pred_check_branch
      %26 = sbr.rel (0) target = $region17
    $region16: #{model_forward.1} parent=1 // pred_region
      _
    $region17: #{model_forward.1} parent=1 // pred_fallthru
      _
    // Predicated region
    $region18: #{model_forward.1} parent=1 // pred_check
      _
    $region19: #{model_forward.1} parent=1 // pred_check_branch
      %28 = sbr.rel (0) target = $region21
    $region20: #{model_forward.1} parent=1 // pred_region
      %29 = dma.done [#allocation4], 16
    $region21: #{model_forward.1} parent=1 // pred_fallthru
      _
    %30 = sfence
    %v31 = vld [vmem:[%s1] sm:$0xff]
    %v32 = vld [vmem:[%s1 + $0x8] sm:$0xff]
    %v33 = vld [vmem:[%s1 + $0x10] sm:$0xff]
    %v34 = vld [vmem:[%s1 + $0x18] sm:$0xff]
    %v35 = vld [vmem:[%s2] sm:$0xff]
    %v36 = vld [vmem:[%s2 + $0x8] sm:$0xff]
    %v37 = vld [vmem:[%s2 + $0x10] sm:$0xff]
    %v38 = vld [vmem:[%s2 + $0x18] sm:$0xff]
    %s39 = sld [smem:[#allocation2]]
    %v40 = vstv %s39
    %v41 = vmul.f32 %v40, %v31
    %v42 = vmul.f32 %v40, %v32
    %v43 = vmul.f32 %v40, %v33
    %v44 = vmul.f32 %v40, %v34
    %s45 = sld [smem:[#allocation2 + $0x1]]
    %v46 = vstv %s45
    %v47 = vmul.f32 %v46, %v35
    %v48 = vmul.f32 %v46, %v36
    %v49 = vmul.f32 %v46, %v37
    %v50 = vmul.f32 %v46, %v38
    %v51 = vadd.f32 %v41, %v47
    %v52 = vadd.f32 %v42, %v48
    %v53 = vadd.f32 %v43, %v49
    %v54 = vadd.f32 %v44, %v50
    %s55 = sld [smem:[#allocation2 + $0x2]]
    %v56 = vstv %s55
    %vm57 = vcmp.ge.f32.partialorder %v51, %v56
    %vm58 = vcmp.ge.f32.partialorder %v52, %v56
    %vm59 = vcmp.ge.f32.partialorder %v53, %v56
    %vm60 = vcmp.ge.f32.partialorder %v54, %v56
    %s61 = sld [smem:[#allocation2 + $0x3]]
    %v62 = vstv %s61
    %v63 = vmul.f32 %v62, %v31
    %v64 = vmul.f32 %v62, %v32
    %v65 = vmul.f32 %v62, %v33
    %v66 = vmul.f32 %v62, %v34
    %s67 = sld [smem:[#allocation2 + $0x4]]
    %v68 = vstv %s67
    %v69 = vmul.f32 %v68, %v35
    %v70 = vmul.f32 %v68, %v36
    %v71 = vmul.f32 %v68, %v37
    %v72 = vmul.f32 %v68, %v38
    %v73 = vadd.f32 %v63, %v69
    %v74 = vadd.f32 %v64, %v70
    %v75 = vadd.f32 %v65, %v71
    %v76 = vadd.f32 %v66, %v72
    %s77 = sld [smem:[#allocation2 + $0x5]]
    %v78 = vstv %s77
    %vm79 = vcmp.ge.f32.partialorder %v73, %v78
    %vm80 = vcmp.ge.f32.partialorder %v74, %v78
    %vm81 = vcmp.ge.f32.partialorder %v75, %v78
    %vm82 = vcmp.ge.f32.partialorder %v76, %v78
    %vm83 = vmand %vm57, %vm79
    %vm84 = vmand %vm58, %vm80
    %vm85 = vmand %vm59, %vm81
    %vm86 = vmand %vm60, %vm82
    %s87 = sld [smem:[#allocation2 + $0x6]]
    %v88 = vstv %s87
    %v89 = vmul.f32 %v88, %v31
    %v90 = vmul.f32 %v88, %v32
    %v91 = vmul.f32 %v88, %v33
    %v92 = vmul.f32 %v88, %v34
    %s93 = sld [smem:[#allocation2 + $0x7]]
    %v94 = vstv %s93
    %v95 = vmul.f32 %v94, %v35
    %v96 = vmul.f32 %v94, %v36
    %v97 = vmul.f32 %v94, %v37
    %v98 = vmul.f32 %v94, %v38
    %v99 = vadd.f32 %v89, %v95
    %v100 = vadd.f32 %v90, %v96
    %v101 = vadd.f32 %v91, %v97
    %v102 = vadd.f32 %v92, %v98
    %s103 = sld [smem:[#allocation2 + $0x8]]
    %v104 = vstv %s103
    %vm105 = vcmp.ge.f32.partialorder %v99, %v104
    %vm106 = vcmp.ge.f32.partialorder %v100, %v104
    %vm107 = vcmp.ge.f32.partialorder %v101, %v104
    %vm108 = vcmp.ge.f32.partialorder %v102, %v104
    %vm109 = vmand %vm83, %vm105
    %vm110 = vmand %vm84, %vm106
    %vm111 = vmand %vm85, %vm107
    %vm112 = vmand %vm86, %vm108
    %s113 = sld [smem:[#allocation2 + $0x9]]
    %v114 = vstv %s113
    %v115 = vmul.f32 %v114, %v31
    %v116 = vmul.f32 %v114, %v32
    %v117 = vmul.f32 %v114, %v33
    %v118 = vmul.f32 %v114, %v34
    %s119 = sld [smem:[#allocation2 + $0xa]]
    %v120 = vstv %s119
    %v121 = vmul.f32 %v120, %v35
    %v122 = vmul.f32 %v120, %v36
    %v123 = vmul.f32 %v120, %v37
    %v124 = vmul.f32 %v120, %v38
    %v125 = vadd.f32 %v115, %v121
    %v126 = vadd.f32 %v116, %v122
    %v127 = vadd.f32 %v117, %v123
    %v128 = vadd.f32 %v118, %v124
    %s129 = sld [smem:[#allocation2 + $0xb]]
    %v130 = vstv %s129
    %vm131 = vcmp.ge.f32.partialorder %v125, %v130
    %vm132 = vcmp.ge.f32.partialorder %v126, %v130
    %vm133 = vcmp.ge.f32.partialorder %v127, %v130
    %vm134 = vcmp.ge.f32.partialorder %v128, %v130
    %s135 = sld [smem:[#allocation2 + $0xc]]
    %v136 = vstv %s135
    %v137 = vmul.f32 %v136, %v31
    %v138 = vmul.f32 %v136, %v32
    %v139 = vmul.f32 %v136, %v33
    %v140 = vmul.f32 %v136, %v34
    %s141 = sld [smem:[#allocation2 + $0xd]]
    %v142 = vstv %s141
    %v143 = vmul.f32 %v142, %v35
    %v144 = vmul.f32 %v142, %v36
    %v145 = vmul.f32 %v142, %v37
    %v146 = vmul.f32 %v142, %v38
    %v147 = vadd.f32 %v137, %v143
    %v148 = vadd.f32 %v138, %v144
    %v149 = vadd.f32 %v139, %v145
    %v150 = vadd.f32 %v140, %v146
    %s151 = sld [smem:[#allocation2 + $0xe]]
    %v152 = vstv %s151
    %vm153 = vcmp.ge.f32.partialorder %v147, %v152
    %vm154 = vcmp.ge.f32.partialorder %v148, %v152
    %vm155 = vcmp.ge.f32.partialorder %v149, %v152
    %vm156 = vcmp.ge.f32.partialorder %v150, %v152
    %vm157 = vmand %vm131, %vm153
    %vm158 = vmand %vm132, %vm154
    %vm159 = vmand %vm133, %vm155
    %vm160 = vmand %vm134, %vm156
    %s161 = sld [smem:[#allocation2 + $0xf]]
    %v162 = vstv %s161
    %v163 = vmul.f32 %v162, %v31
    %v164 = vmul.f32 %v162, %v32
    %v165 = vmul.f32 %v162, %v33
    %v166 = vmul.f32 %v162, %v34
    %s167 = sld [smem:[#allocation2 + $0x10]]
    %v168 = vstv %s167
    %v169 = vmul.f32 %v168, %v35
    %v170 = vmul.f32 %v168, %v36
    %v171 = vmul.f32 %v168, %v37
    %v172 = vmul.f32 %v168, %v38
    %v173 = vadd.f32 %v163, %v169
    %v174 = vadd.f32 %v164, %v170
    %v175 = vadd.f32 %v165, %v171
    %v176 = vadd.f32 %v166, %v172
    %s177 = sld [smem:[#allocation2 + $0x11]]
    %v178 = vstv %s177
    %vm179 = vcmp.ge.f32.partialorder %v173, %v178
    %vm180 = vcmp.ge.f32.partialorder %v174, %v178
    %vm181 = vcmp.ge.f32.partialorder %v175, %v178
    %vm182 = vcmp.ge.f32.partialorder %v176, %v178
    %vm183 = vmand %vm157, %vm179
    %vm184 = vmand %vm158, %vm180
    %vm185 = vmand %vm159, %vm181
    %vm186 = vmand %vm160, %vm182
    %vm187 = vmor %vm109, %vm183
    %vm188 = vmor %vm110, %vm184
    %vm189 = vmor %vm111, %vm185
    %vm190 = vmor %vm112, %vm186
    %s191 = sld [smem:[#allocation2 + $0x12]]
    %v192 = vstv %s191
    %v193 = vmul.f32 %v192, %v31
    %v194 = vmul.f32 %v192, %v32
    %v195 = vmul.f32 %v192, %v33
    %v196 = vmul.f32 %v192, %v34
    %s197 = sld [smem:[#allocation2 + $0x13]]
    %v198 = vstv %s197
    %v199 = vmul.f32 %v198, %v35
    %v200 = vmul.f32 %v198, %v36
    %v201 = vmul.f32 %v198, %v37
    %v202 = vmul.f32 %v198, %v38
    %v203 = vadd.f32 %v193, %v199
    %v204 = vadd.f32 %v194, %v200
    %v205 = vadd.f32 %v195, %v201
    %v206 = vadd.f32 %v196, %v202
    %s207 = sld [smem:[#allocation2 + $0x14]]
    %v208 = vstv %s207
    %vm209 = vcmp.ge.f32.partialorder %v203, %v208
    %vm210 = vcmp.ge.f32.partialorder %v204, %v208
    %vm211 = vcmp.ge.f32.partialorder %v205, %v208
    %vm212 = vcmp.ge.f32.partialorder %v206, %v208
    %s213 = sld [smem:[#allocation2 + $0x15]]
    %v214 = vstv %s213
    %v215 = vmul.f32 %v214, %v31
    %v216 = vmul.f32 %v214, %v32
    %v217 = vmul.f32 %v214, %v33
    %v218 = vmul.f32 %v214, %v34
    %s219 = sld [smem:[#allocation2 + $0x16]]
    %v220 = vstv %s219
    %v221 = vmul.f32 %v220, %v35
    %v222 = vmul.f32 %v220, %v36
    %v223 = vmul.f32 %v220, %v37
    %v224 = vmul.f32 %v220, %v38
    %v225 = vadd.f32 %v215, %v221
    %v226 = vadd.f32 %v216, %v222
    %v227 = vadd.f32 %v217, %v223
    %v228 = vadd.f32 %v218, %v224
    %s229 = sld [smem:[#allocation2 + $0x17]]
    %v230 = vstv %s229
    %vm231 = vcmp.ge.f32.partialorder %v225, %v230
    %vm232 = vcmp.ge.f32.partialorder %v226, %v230
    %vm233 = vcmp.ge.f32.partialorder %v227, %v230
    %vm234 = vcmp.ge.f32.partialorder %v228, %v230
    %vm235 = vmand %vm209, %vm231
    %vm236 = vmand %vm210, %vm232
    %vm237 = vmand %vm211, %vm233
    %vm238 = vmand %vm212, %vm234
    %s239 = sld [smem:[#allocation2 + $0x18]]
    %v240 = vstv %s239
    %v241 = vmul.f32 %v240, %v31
    %v242 = vmul.f32 %v240, %v32
    %v243 = vmul.f32 %v240, %v33
    %v244 = vmul.f32 %v240, %v34
    %s245 = sld [smem:[#allocation2 + $0x19]]
    %v246 = vstv %s245
    %v247 = vmul.f32 %v246, %v35
    %v248 = vmul.f32 %v246, %v36
    %v249 = vmul.f32 %v246, %v37
    %v250 = vmul.f32 %v246, %v38
    %v251 = vadd.f32 %v241, %v247
    %v252 = vadd.f32 %v242, %v248
    %v253 = vadd.f32 %v243, %v249
    %v254 = vadd.f32 %v244, %v250
    %s255 = sld [smem:[#allocation2 + $0x1a]]
    %v256 = vstv %s255
    %vm257 = vcmp.ge.f32.partialorder %v251, %v256
    %vm258 = vcmp.ge.f32.partialorder %v252, %v256
    %vm259 = vcmp.ge.f32.partialorder %v253, %v256
    %vm260 = vcmp.ge.f32.partialorder %v254, %v256
    %vm261 = vmand %vm235, %vm257
    %vm262 = vmand %vm236, %vm258
    %vm263 = vmand %vm237, %vm259
    %vm264 = vmand %vm238, %vm260
    %vm265 = vmor %vm187, %vm261
    %vm266 = vmor %vm188, %vm262
    %vm267 = vmor %vm189, %vm263
    %vm268 = vmor %vm190, %vm264
    %s269 = sld [smem:[#allocation2 + $0x1b]]
    %v270 = vstv %s269
    %v271 = vmul.f32 %v270, %v31
    %v272 = vmul.f32 %v270, %v32
    %v273 = vmul.f32 %v270, %v33
    %v274 = vmul.f32 %v270, %v34
    %s275 = sld [smem:[#allocation2 + $0x1c]]
    %v276 = vstv %s275
    %v277 = vmul.f32 %v276, %v35
    %v278 = vmul.f32 %v276, %v36
    %v279 = vmul.f32 %v276, %v37
    %v280 = vmul.f32 %v276, %v38
    %v281 = vadd.f32 %v271, %v277
    %v282 = vadd.f32 %v272, %v278
    %v283 = vadd.f32 %v273, %v279
    %v284 = vadd.f32 %v274, %v280
    %s285 = sld [smem:[#allocation2 + $0x1d]]
    %v286 = vstv %s285
    %vm287 = vcmp.ge.f32.partialorder %v281, %v286
    %vm288 = vcmp.ge.f32.partialorder %v282, %v286
    %vm289 = vcmp.ge.f32.partialorder %v283, %v286
    %vm290 = vcmp.ge.f32.partialorder %v284, %v286
    %s291 = sld [smem:[#allocation2 + $0x1e]]
    %v292 = vstv %s291
    %v293 = vmul.f32 %v292, %v31
    %v294 = vmul.f32 %v292, %v32
    %v295 = vmul.f32 %v292, %v33
    %v296 = vmul.f32 %v292, %v34
    %s297 = sld [smem:[#allocation2 + $0x1f]]
    %v298 = vstv %s297
    %v299 = vmul.f32 %v298, %v35
    %v300 = vmul.f32 %v298, %v36
    %v301 = vmul.f32 %v298, %v37
    %v302 = vmul.f32 %v298, %v38
    %v303 = vadd.f32 %v293, %v299
    %v304 = vadd.f32 %v294, %v300
    %v305 = vadd.f32 %v295, %v301
    %v306 = vadd.f32 %v296, %v302
    %s307 = sld [smem:[#allocation2 + $0x20]]
    %v308 = vstv %s307
    %vm309 = vcmp.ge.f32.partialorder %v303, %v308
    %vm310 = vcmp.ge.f32.partialorder %v304, %v308
    %vm311 = vcmp.ge.f32.partialorder %v305, %v308
    %vm312 = vcmp.ge.f32.partialorder %v306, %v308
    %vm313 = vmand %vm287, %vm309
    %vm314 = vmand %vm288, %vm310
    %vm315 = vmand %vm289, %vm311
    %vm316 = vmand %vm290, %vm312
    %s317 = sld [smem:[#allocation2 + $0x21]]
    %v318 = vstv %s317
    %v319 = vmul.f32 %v318, %v31
    %v320 = vmul.f32 %v318, %v32
    %v321 = vmul.f32 %v318, %v33
    %v322 = vmul.f32 %v318, %v34
    %s323 = sld [smem:[#allocation2 + $0x22]]
    %v324 = vstv %s323
    %v325 = vmul.f32 %v324, %v35
    %v326 = vmul.f32 %v324, %v36
    %v327 = vmul.f32 %v324, %v37
    %v328 = vmul.f32 %v324, %v38
    %v329 = vadd.f32 %v319, %v325
    %v330 = vadd.f32 %v320, %v326
    %v331 = vadd.f32 %v321, %v327
    %v332 = vadd.f32 %v322, %v328
    %s333 = sld [smem:[#allocation2 + $0x23]]
    %v334 = vstv %s333
    %vm335 = vcmp.ge.f32.partialorder %v329, %v334
    %vm336 = vcmp.ge.f32.partialorder %v330, %v334
    %vm337 = vcmp.ge.f32.partialorder %v331, %v334
    %vm338 = vcmp.ge.f32.partialorder %v332, %v334
    %vm339 = vmand %vm313, %vm335
    %vm340 = vmand %vm314, %vm336
    %vm341 = vmand %vm315, %vm337
    %vm342 = vmand %vm316, %vm338
    %vm343 = vmor %vm265, %vm339
    %vm344 = vmor %vm266, %vm340
    %vm345 = vmor %vm267, %vm341
    %vm346 = vmor %vm268, %vm342
    %s347 = sld [smem:[#allocation2 + $0x24]]
    %v348 = vstv %s347
    %v349 = vmul.f32 %v348, %v31
    %v350 = vmul.f32 %v348, %v32
    %v351 = vmul.f32 %v348, %v33
    %v352 = vmul.f32 %v348, %v34
    %s353 = sld [smem:[#allocation2 + $0x25]]
    %v354 = vstv %s353
    %v355 = vmul.f32 %v354, %v35
    %v356 = vmul.f32 %v354, %v36
    %v357 = vmul.f32 %v354, %v37
    %v358 = vmul.f32 %v354, %v38
    %v359 = vadd.f32 %v349, %v355
    %v360 = vadd.f32 %v350, %v356
    %v361 = vadd.f32 %v351, %v357
    %v362 = vadd.f32 %v352, %v358
    %s363 = sld [smem:[#allocation2 + $0x26]]
    %v364 = vstv %s363
    %vm365 = vcmp.ge.f32.partialorder %v359, %v364
    %vm366 = vcmp.ge.f32.partialorder %v360, %v364
    %vm367 = vcmp.ge.f32.partialorder %v361, %v364
    %vm368 = vcmp.ge.f32.partialorder %v362, %v364
    %s369 = sld [smem:[#allocation2 + $0x27]]
    %v370 = vstv %s369
    %v371 = vmul.f32 %v370, %v31
    %v372 = vmul.f32 %v370, %v32
    %v373 = vmul.f32 %v370, %v33
    %v374 = vmul.f32 %v370, %v34
    %s375 = sld [smem:[#allocation2 + $0x28]]
    %v376 = vstv %s375
    %v377 = vmul.f32 %v376, %v35
    %v378 = vmul.f32 %v376, %v36
    %v379 = vmul.f32 %v376, %v37
    %v380 = vmul.f32 %v376, %v38
    %v381 = vadd.f32 %v371, %v377
    %v382 = vadd.f32 %v372, %v378
    %v383 = vadd.f32 %v373, %v379
    %v384 = vadd.f32 %v374, %v380
    %s385 = sld [smem:[#allocation2 + $0x29]]
    %v386 = vstv %s385
    %vm387 = vcmp.ge.f32.partialorder %v381, %v386
    %vm388 = vcmp.ge.f32.partialorder %v382, %v386
    %vm389 = vcmp.ge.f32.partialorder %v383, %v386
    %vm390 = vcmp.ge.f32.partialorder %v384, %v386
    %vm391 = vmand %vm365, %vm387
    %vm392 = vmand %vm366, %vm388
    %vm393 = vmand %vm367, %vm389
    %vm394 = vmand %vm368, %vm390
    %s395 = sld [smem:[#allocation2 + $0x2a]]
    %v396 = vstv %s395
    %v397 = vmul.f32 %v396, %v31
    %v398 = vmul.f32 %v396, %v32
    %v399 = vmul.f32 %v396, %v33
    %v400 = vmul.f32 %v396, %v34
    %s401 = sld [smem:[#allocation2 + $0x2b]]
    %v402 = vstv %s401
    %v403 = vmul.f32 %v402, %v35
    %v404 = vmul.f32 %v402, %v36
    %v405 = vmul.f32 %v402, %v37
    %v406 = vmul.f32 %v402, %v38
    %v407 = vadd.f32 %v397, %v403
    %v408 = vadd.f32 %v398, %v404
    %v409 = vadd.f32 %v399, %v405
    %v410 = vadd.f32 %v400, %v406
    %s411 = sld [smem:[#allocation2 + $0x2c]]
    %v412 = vstv %s411
    %vm413 = vcmp.ge.f32.partialorder %v407, %v412
    %vm414 = vcmp.ge.f32.partialorder %v408, %v412
    %vm415 = vcmp.ge.f32.partialorder %v409, %v412
    %vm416 = vcmp.ge.f32.partialorder %v410, %v412
    %vm417 = vmand %vm391, %vm413
    %vm418 = vmand %vm392, %vm414
    %vm419 = vmand %vm393, %vm415
    %vm420 = vmand %vm394, %vm416
    %vm421 = vmor %vm343, %vm417
    %vm422 = vmor %vm344, %vm418
    %vm423 = vmor %vm345, %vm419
    %vm424 = vmor %vm346, %vm420
    %s425 = sld [smem:[#allocation2 + $0x2d]]
    %v426 = vstv %s425
    %v427 = vmul.f32 %v426, %v31
    %v428 = vmul.f32 %v426, %v32
    %v429 = vmul.f32 %v426, %v33
    %v430 = vmul.f32 %v426, %v34
    %s431 = sld [smem:[#allocation2 + $0x2e]]
    %v432 = vstv %s431
    %v433 = vmul.f32 %v432, %v35
    %v434 = vmul.f32 %v432, %v36
    %v435 = vmul.f32 %v432, %v37
    %v436 = vmul.f32 %v432, %v38
    %v437 = vadd.f32 %v427, %v433
    %v438 = vadd.f32 %v428, %v434
    %v439 = vadd.f32 %v429, %v435
    %v440 = vadd.f32 %v430, %v436
    %s441 = sld [smem:[#allocation2 + $0x2f]]
    %v442 = vstv %s441
    %vm443 = vcmp.ge.f32.partialorder %v437, %v442
    %vm444 = vcmp.ge.f32.partialorder %v438, %v442
    %vm445 = vcmp.ge.f32.partialorder %v439, %v442
    %vm446 = vcmp.ge.f32.partialorder %v440, %v442
    %s447 = sld [smem:[#allocation2 + $0x30]]
    %v448 = vstv %s447
    %v449 = vmul.f32 %v448, %v31
    %v450 = vmul.f32 %v448, %v32
    %v451 = vmul.f32 %v448, %v33
    %v452 = vmul.f32 %v448, %v34
    %s453 = sld [smem:[#allocation2 + $0x31]]
    %v454 = vstv %s453
    %v455 = vmul.f32 %v454, %v35
    %v456 = vmul.f32 %v454, %v36
    %v457 = vmul.f32 %v454, %v37
    %v458 = vmul.f32 %v454, %v38
    %v459 = vadd.f32 %v449, %v455
    %v460 = vadd.f32 %v450, %v456
    %v461 = vadd.f32 %v451, %v457
    %v462 = vadd.f32 %v452, %v458
    %s463 = sld [smem:[#allocation2 + $0x32]]
    %v464 = vstv %s463
    %vm465 = vcmp.ge.f32.partialorder %v459, %v464
    %vm466 = vcmp.ge.f32.partialorder %v460, %v464
    %vm467 = vcmp.ge.f32.partialorder %v461, %v464
    %vm468 = vcmp.ge.f32.partialorder %v462, %v464
    %vm469 = vmand %vm443, %vm465
    %vm470 = vmand %vm444, %vm466
    %vm471 = vmand %vm445, %vm467
    %vm472 = vmand %vm446, %vm468
    %s473 = sld [smem:[#allocation2 + $0x33]]
    %v474 = vstv %s473
    %v475 = vmul.f32 %v474, %v31
    %v476 = vmul.f32 %v474, %v32
    %v477 = vmul.f32 %v474, %v33
    %v478 = vmul.f32 %v474, %v34
    %s479 = sld [smem:[#allocation2 + $0x34]]
    %v480 = vstv %s479
    %v481 = vmul.f32 %v480, %v35
    %v482 = vmul.f32 %v480, %v36
    %v483 = vmul.f32 %v480, %v37
    %v484 = vmul.f32 %v480, %v38
    %v485 = vadd.f32 %v475, %v481
    %v486 = vadd.f32 %v476, %v482
    %v487 = vadd.f32 %v477, %v483
    %v488 = vadd.f32 %v478, %v484
    %s489 = sld [smem:[#allocation2 + $0x35]]
    %v490 = vstv %s489
    %vm491 = vcmp.ge.f32.partialorder %v485, %v490
    %vm492 = vcmp.ge.f32.partialorder %v486, %v490
    %vm493 = vcmp.ge.f32.partialorder %v487, %v490
    %vm494 = vcmp.ge.f32.partialorder %v488, %v490
    %vm495 = vmand %vm469, %vm491
    %vm496 = vmand %vm470, %vm492
    %vm497 = vmand %vm471, %vm493
    %vm498 = vmand %vm472, %vm494
    %vm499 = vmor %vm421, %vm495
    %vm500 = vmor %vm422, %vm496
    %vm501 = vmor %vm423, %vm497
    %vm502 = vmor %vm424, %vm498
    %s503 = sld [smem:[#allocation2 + $0x36]]
    %v504 = vstv %s503
    %v505 = vmul.f32 %v504, %v31
    %v506 = vmul.f32 %v504, %v32
    %v507 = vmul.f32 %v504, %v33
    %v508 = vmul.f32 %v504, %v34
    %s509 = sld [smem:[#allocation2 + $0x37]]
    %v510 = vstv %s509
    %v511 = vmul.f32 %v510, %v35
    %v512 = vmul.f32 %v510, %v36
    %v513 = vmul.f32 %v510, %v37
    %v514 = vmul.f32 %v510, %v38
    %v515 = vadd.f32 %v505, %v511
    %v516 = vadd.f32 %v506, %v512
    %v517 = vadd.f32 %v507, %v513
    %v518 = vadd.f32 %v508, %v514
    %s519 = sld [smem:[#allocation2 + $0x38]]
    %v520 = vstv %s519
    %vm521 = vcmp.ge.f32.partialorder %v515, %v520
    %vm522 = vcmp.ge.f32.partialorder %v516, %v520
    %vm523 = vcmp.ge.f32.partialorder %v517, %v520
    %vm524 = vcmp.ge.f32.partialorder %v518, %v520
    %s525 = sld [smem:[#allocation2 + $0x39]]
    %v526 = vstv %s525
    %v527 = vmul.f32 %v526, %v31
    %v528 = vmul.f32 %v526, %v32
    %v529 = vmul.f32 %v526, %v33
    %v530 = vmul.f32 %v526, %v34
    %s531 = sld [smem:[#allocation2 + $0x3a]]
    %v532 = vstv %s531
    %v533 = vmul.f32 %v532, %v35
    %v534 = vmul.f32 %v532, %v36
    %v535 = vmul.f32 %v532, %v37
    %v536 = vmul.f32 %v532, %v38
    %v537 = vadd.f32 %v527, %v533
    %v538 = vadd.f32 %v528, %v534
    %v539 = vadd.f32 %v529, %v535
    %v540 = vadd.f32 %v530, %v536
    %s541 = sld [smem:[#allocation2 + $0x3b]]
    %v542 = vstv %s541
    %vm543 = vcmp.ge.f32.partialorder %v537, %v542
    %vm544 = vcmp.ge.f32.partialorder %v538, %v542
    %vm545 = vcmp.ge.f32.partialorder %v539, %v542
    %vm546 = vcmp.ge.f32.partialorder %v540, %v542
    %vm547 = vmand %vm521, %vm543
    %vm548 = vmand %vm522, %vm544
    %vm549 = vmand %vm523, %vm545
    %vm550 = vmand %vm524, %vm546
    %s551 = sld [smem:[#allocation2 + $0x3c]]
    %v552 = vstv %s551
    %v553 = vmul.f32 %v552, %v31
    %v554 = vmul.f32 %v552, %v32
    %v555 = vmul.f32 %v552, %v33
    %v556 = vmul.f32 %v552, %v34
    %s557 = sld [smem:[#allocation2 + $0x3d]]
    %v558 = vstv %s557
    %v559 = vmul.f32 %v558, %v35
    %v560 = vmul.f32 %v558, %v36
    %v561 = vmul.f32 %v558, %v37
    %v562 = vmul.f32 %v558, %v38
    %v563 = vadd.f32 %v553, %v559
    %v564 = vadd.f32 %v554, %v560
    %v565 = vadd.f32 %v555, %v561
    %v566 = vadd.f32 %v556, %v562
    %s567 = sld [smem:[#allocation2 + $0x3e]]
    %v568 = vstv %s567
    %vm569 = vcmp.ge.f32.partialorder %v563, %v568
    %vm570 = vcmp.ge.f32.partialorder %v564, %v568
    %vm571 = vcmp.ge.f32.partialorder %v565, %v568
    %vm572 = vcmp.ge.f32.partialorder %v566, %v568
    %vm573 = vmand %vm547, %vm569
    %vm574 = vmand %vm548, %vm570
    %vm575 = vmand %vm549, %vm571
    %vm576 = vmand %vm550, %vm572
    %vm577 = vmor %vm499, %vm573
    %vm578 = vmor %vm500, %vm574
    %vm579 = vmor %vm501, %vm575
    %vm580 = vmor %vm502, %vm576
    %s581 = sld [smem:[#allocation2 + $0x3f]]
    %v582 = vstv %s581
    %v583 = vmul.f32 %v582, %v31
    %v584 = vmul.f32 %v582, %v32
    %v585 = vmul.f32 %v582, %v33
    %v586 = vmul.f32 %v582, %v34
    %s587 = sld [smem:[#allocation2 + $0x40]]
    %v588 = vstv %s587
    %v589 = vmul.f32 %v588, %v35
    %v590 = vmul.f32 %v588, %v36
    %v591 = vmul.f32 %v588, %v37
    %v592 = vmul.f32 %v588, %v38
    %v593 = vadd.f32 %v583, %v589
    %v594 = vadd.f32 %v584, %v590
    %v595 = vadd.f32 %v585, %v591
    %v596 = vadd.f32 %v586, %v592
    %s597 = sld [smem:[#allocation2 + $0x41]]
    %v598 = vstv %s597
    %vm599 = vcmp.ge.f32.partialorder %v593, %v598
    %vm600 = vcmp.ge.f32.partialorder %v594, %v598
    %vm601 = vcmp.ge.f32.partialorder %v595, %v598
    %vm602 = vcmp.ge.f32.partialorder %v596, %v598
    %s603 = sld [smem:[#allocation2 + $0x42]]
    %v604 = vstv %s603
    %v605 = vmul.f32 %v604, %v31
    %v606 = vmul.f32 %v604, %v32
    %v607 = vmul.f32 %v604, %v33
    %v608 = vmul.f32 %v604, %v34
    %s609 = sld [smem:[#allocation2 + $0x43]]
    %v610 = vstv %s609
    %v611 = vmul.f32 %v610, %v35
    %v612 = vmul.f32 %v610, %v36
    %v613 = vmul.f32 %v610, %v37
    %v614 = vmul.f32 %v610, %v38
    %v615 = vadd.f32 %v605, %v611
    %v616 = vadd.f32 %v606, %v612
    %v617 = vadd.f32 %v607, %v613
    %v618 = vadd.f32 %v608, %v614
    %s619 = sld [smem:[#allocation2 + $0x44]]
    %v620 = vstv %s619
    %vm621 = vcmp.ge.f32.partialorder %v615, %v620
    %vm622 = vcmp.ge.f32.partialorder %v616, %v620
    %vm623 = vcmp.ge.f32.partialorder %v617, %v620
    %vm624 = vcmp.ge.f32.partialorder %v618, %v620
    %vm625 = vmand %vm599, %vm621
    %vm626 = vmand %vm600, %vm622
    %vm627 = vmand %vm601, %vm623
    %vm628 = vmand %vm602, %vm624
    %s629 = sld [smem:[#allocation2 + $0x45]]
    %v630 = vstv %s629
    %v631 = vmul.f32 %v630, %v31
    %v632 = vmul.f32 %v630, %v32
    %v633 = vmul.f32 %v630, %v33
    %v634 = vmul.f32 %v630, %v34
    %s635 = sld [smem:[#allocation2 + $0x46]]
    %v636 = vstv %s635
    %v637 = vmul.f32 %v636, %v35
    %v638 = vmul.f32 %v636, %v36
    %v639 = vmul.f32 %v636, %v37
    %v640 = vmul.f32 %v636, %v38
    %v641 = vadd.f32 %v631, %v637
    %v642 = vadd.f32 %v632, %v638
    %v643 = vadd.f32 %v633, %v639
    %v644 = vadd.f32 %v634, %v640
    %s645 = sld [smem:[#allocation2 + $0x47]]
    %v646 = vstv %s645
    %vm647 = vcmp.ge.f32.partialorder %v641, %v646
    %vm648 = vcmp.ge.f32.partialorder %v642, %v646
    %vm649 = vcmp.ge.f32.partialorder %v643, %v646
    %vm650 = vcmp.ge.f32.partialorder %v644, %v646
    %vm651 = vmand %vm625, %vm647
    %vm652 = vmand %vm626, %vm648
    %vm653 = vmand %vm627, %vm649
    %vm654 = vmand %vm628, %vm650
    %vm655 = vmor %vm577, %vm651
    %vm656 = vmor %vm578, %vm652
    %vm657 = vmor %vm579, %vm653
    %vm658 = vmor %vm580, %vm654
    %s659 = sld [smem:[#allocation2 + $0x48]]
    %v660 = vstv %s659
    %v661 = vmul.f32 %v660, %v31
    %v662 = vmul.f32 %v660, %v32
    %v663 = vmul.f32 %v660, %v33
    %v664 = vmul.f32 %v660, %v34
    %s665 = sld [smem:[#allocation2 + $0x49]]
    %v666 = vstv %s665
    %v667 = vmul.f32 %v666, %v35
    %v668 = vmul.f32 %v666, %v36
    %v669 = vmul.f32 %v666, %v37
    %v670 = vmul.f32 %v666, %v38
    %v671 = vadd.f32 %v661, %v667
    %v672 = vadd.f32 %v662, %v668
    %v673 = vadd.f32 %v663, %v669
    %v674 = vadd.f32 %v664, %v670
    %s675 = sld [smem:[#allocation2 + $0x4a]]
    %v676 = vstv %s675
    %vm677 = vcmp.ge.f32.partialorder %v671, %v676
    %vm678 = vcmp.ge.f32.partialorder %v672, %v676
    %vm679 = vcmp.ge.f32.partialorder %v673, %v676
    %vm680 = vcmp.ge.f32.partialorder %v674, %v676
    %s681 = sld [smem:[#allocation2 + $0x4b]]
    %v682 = vstv %s681
    %v683 = vmul.f32 %v682, %v31
    %v684 = vmul.f32 %v682, %v32
    %v685 = vmul.f32 %v682, %v33
    %v686 = vmul.f32 %v682, %v34
    %s687 = sld [smem:[#allocation2 + $0x4c]]
    %v688 = vstv %s687
    %v689 = vmul.f32 %v688, %v35
    %v690 = vmul.f32 %v688, %v36
    %v691 = vmul.f32 %v688, %v37
    %v692 = vmul.f32 %v688, %v38
    %v693 = vadd.f32 %v683, %v689
    %v694 = vadd.f32 %v684, %v690
    %v695 = vadd.f32 %v685, %v691
    %v696 = vadd.f32 %v686, %v692
    %s697 = sld [smem:[#allocation2 + $0x4d]]
    %v698 = vstv %s697
    %vm699 = vcmp.ge.f32.partialorder %v693, %v698
    %vm700 = vcmp.ge.f32.partialorder %v694, %v698
    %vm701 = vcmp.ge.f32.partialorder %v695, %v698
    %vm702 = vcmp.ge.f32.partialorder %v696, %v698
    %vm703 = vmand %vm677, %vm699
    %vm704 = vmand %vm678, %vm700
    %vm705 = vmand %vm679, %vm701
    %vm706 = vmand %vm680, %vm702
    %s707 = sld [smem:[#allocation2 + $0x4e]]
    %v708 = vstv %s707
    %v709 = vmul.f32 %v708, %v31
    %v710 = vmul.f32 %v708, %v32
    %v711 = vmul.f32 %v708, %v33
    %v712 = vmul.f32 %v708, %v34
    %s713 = sld [smem:[#allocation2 + $0x4f]]
    %v714 = vstv %s713
    %v715 = vmul.f32 %v714, %v35
    %v716 = vmul.f32 %v714, %v36
    %v717 = vmul.f32 %v714, %v37
    %v718 = vmul.f32 %v714, %v38
    %v719 = vadd.f32 %v709, %v715
    %v720 = vadd.f32 %v710, %v716
    %v721 = vadd.f32 %v711, %v717
    %v722 = vadd.f32 %v712, %v718
    %s723 = sld [smem:[#allocation2 + $0x50]]
    %v724 = vstv %s723
    %vm725 = vcmp.ge.f32.partialorder %v719, %v724
    %vm726 = vcmp.ge.f32.partialorder %v720, %v724
    %vm727 = vcmp.ge.f32.partialorder %v721, %v724
    %vm728 = vcmp.ge.f32.partialorder %v722, %v724
    %vm729 = vmand %vm703, %vm725
    %vm730 = vmand %vm704, %vm726
    %vm731 = vmand %vm705, %vm727
    %vm732 = vmand %vm706, %vm728
    %vm733 = vmor %vm655, %vm729
    %vm734 = vmor %vm656, %vm730
    %vm735 = vmor %vm657, %vm731
    %vm736 = vmor %vm658, %vm732
    %s737 = sld [smem:[#allocation2 + $0x51]]
    %v738 = vstv %s737
    %v739 = vmul.f32 %v738, %v31
    %v740 = vmul.f32 %v738, %v32
    %v741 = vmul.f32 %v738, %v33
    %v742 = vmul.f32 %v738, %v34
    %s743 = sld [smem:[#allocation2 + $0x52]]
    %v744 = vstv %s743
    %v745 = vmul.f32 %v744, %v35
    %v746 = vmul.f32 %v744, %v36
    %v747 = vmul.f32 %v744, %v37
    %v748 = vmul.f32 %v744, %v38
    %v749 = vadd.f32 %v739, %v745
    %v750 = vadd.f32 %v740, %v746
    %v751 = vadd.f32 %v741, %v747
    %v752 = vadd.f32 %v742, %v748
    %s753 = sld [smem:[#allocation2 + $0x53]]
    %v754 = vstv %s753
    %vm755 = vcmp.ge.f32.partialorder %v749, %v754
    %vm756 = vcmp.ge.f32.partialorder %v750, %v754
    %vm757 = vcmp.ge.f32.partialorder %v751, %v754
    %vm758 = vcmp.ge.f32.partialorder %v752, %v754
    %s759 = sld [smem:[#allocation2 + $0x54]]
    %v760 = vstv %s759
    %v761 = vmul.f32 %v760, %v31
    %v762 = vmul.f32 %v760, %v32
    %v763 = vmul.f32 %v760, %v33
    %v764 = vmul.f32 %v760, %v34
    %s765 = sld [smem:[#allocation2 + $0x55]]
    %v766 = vstv %s765
    %v767 = vmul.f32 %v766, %v35
    %v768 = vmul.f32 %v766, %v36
    %v769 = vmul.f32 %v766, %v37
    %v770 = vmul.f32 %v766, %v38
    %v771 = vadd.f32 %v761, %v767
    %v772 = vadd.f32 %v762, %v768
    %v773 = vadd.f32 %v763, %v769
    %v774 = vadd.f32 %v764, %v770
    %s775 = sld [smem:[#allocation2 + $0x56]]
    %v776 = vstv %s775
    %vm777 = vcmp.ge.f32.partialorder %v771, %v776
    %vm778 = vcmp.ge.f32.partialorder %v772, %v776
    %vm779 = vcmp.ge.f32.partialorder %v773, %v776
    %vm780 = vcmp.ge.f32.partialorder %v774, %v776
    %vm781 = vmand %vm755, %vm777
    %vm782 = vmand %vm756, %vm778
    %vm783 = vmand %vm757, %vm779
    %vm784 = vmand %vm758, %vm780
    %s785 = sld [smem:[#allocation2 + $0x57]]
    %v786 = vstv %s785
    %v787 = vmul.f32 %v786, %v31
    %v788 = vmul.f32 %v786, %v32
    %v789 = vmul.f32 %v786, %v33
    %v790 = vmul.f32 %v786, %v34
    %s791 = sld [smem:[#allocation2 + $0x58]]
    %v792 = vstv %s791
    %v793 = vmul.f32 %v792, %v35
    %v794 = vmul.f32 %v792, %v36
    %v795 = vmul.f32 %v792, %v37
    %v796 = vmul.f32 %v792, %v38
    %v797 = vadd.f32 %v787, %v793
    %v798 = vadd.f32 %v788, %v794
    %v799 = vadd.f32 %v789, %v795
    %v800 = vadd.f32 %v790, %v796
    %s801 = sld [smem:[#allocation2 + $0x59]]
    %v802 = vstv %s801
    %vm803 = vcmp.ge.f32.partialorder %v797, %v802
    %vm804 = vcmp.ge.f32.partialorder %v798, %v802
    %vm805 = vcmp.ge.f32.partialorder %v799, %v802
    %vm806 = vcmp.ge.f32.partialorder %v800, %v802
    %vm807 = vmand %vm781, %vm803
    %vm808 = vmand %vm782, %vm804
    %vm809 = vmand %vm783, %vm805
    %vm810 = vmand %vm784, %vm806
    %vm811 = vmor %vm733, %vm807
    %vm812 = vmor %vm734, %vm808
    %vm813 = vmor %vm735, %vm809
    %vm814 = vmor %vm736, %vm810
    %s815 = sld [smem:[#allocation2 + $0x5a]]
    %v816 = vstv %s815
    %v817 = vmul.f32 %v816, %v31
    %v818 = vmul.f32 %v816, %v32
    %v819 = vmul.f32 %v816, %v33
    %v820 = vmul.f32 %v816, %v34
    %s821 = sld [smem:[#allocation2 + $0x5b]]
    %v822 = vstv %s821
    %v823 = vmul.f32 %v822, %v35
    %v824 = vmul.f32 %v822, %v36
    %v825 = vmul.f32 %v822, %v37
    %v826 = vmul.f32 %v822, %v38
    %v827 = vadd.f32 %v817, %v823
    %v828 = vadd.f32 %v818, %v824
    %v829 = vadd.f32 %v819, %v825
    %v830 = vadd.f32 %v820, %v826
    %s831 = sld [smem:[#allocation2 + $0x5c]]
    %v832 = vstv %s831
    %vm833 = vcmp.ge.f32.partialorder %v827, %v832
    %vm834 = vcmp.ge.f32.partialorder %v828, %v832
    %vm835 = vcmp.ge.f32.partialorder %v829, %v832
    %vm836 = vcmp.ge.f32.partialorder %v830, %v832
    %s837 = sld [smem:[#allocation2 + $0x5d]]
    %v838 = vstv %s837
    %v839 = vmul.f32 %v838, %v31
    %v840 = vmul.f32 %v838, %v32
    %v841 = vmul.f32 %v838, %v33
    %v842 = vmul.f32 %v838, %v34
    %s843 = sld [smem:[#allocation2 + $0x5e]]
    %v844 = vstv %s843
    %v845 = vmul.f32 %v844, %v35
    %v846 = vmul.f32 %v844, %v36
    %v847 = vmul.f32 %v844, %v37
    %v848 = vmul.f32 %v844, %v38
    %v849 = vadd.f32 %v839, %v845
    %v850 = vadd.f32 %v840, %v846
    %v851 = vadd.f32 %v841, %v847
    %v852 = vadd.f32 %v842, %v848
    %s853 = sld [smem:[#allocation2 + $0x5f]]
    %v854 = vstv %s853
    %vm855 = vcmp.ge.f32.partialorder %v849, %v854
    %vm856 = vcmp.ge.f32.partialorder %v850, %v854
    %vm857 = vcmp.ge.f32.partialorder %v851, %v854
    %vm858 = vcmp.ge.f32.partialorder %v852, %v854
    %vm859 = vmand %vm833, %vm855
    %vm860 = vmand %vm834, %vm856
    %vm861 = vmand %vm835, %vm857
    %vm862 = vmand %vm836, %vm858
    %s863 = sld [smem:[#allocation2 + $0x60]]
    %v864 = vstv %s863
    %v865 = vmul.f32 %v864, %v31
    %v866 = vmul.f32 %v864, %v32
    %v867 = vmul.f32 %v864, %v33
    %v868 = vmul.f32 %v864, %v34
    %s869 = sld [smem:[#allocation2 + $0x61]]
    %v870 = vstv %s869
    %v871 = vmul.f32 %v870, %v35
    %v872 = vmul.f32 %v870, %v36
    %v873 = vmul.f32 %v870, %v37
    %v874 = vmul.f32 %v870, %v38
    %v875 = vadd.f32 %v865, %v871
    %v876 = vadd.f32 %v866, %v872
    %v877 = vadd.f32 %v867, %v873
    %v878 = vadd.f32 %v868, %v874
    %s879 = sld [smem:[#allocation2 + $0x62]]
    %v880 = vstv %s879
    %vm881 = vcmp.ge.f32.partialorder %v875, %v880
    %vm882 = vcmp.ge.f32.partialorder %v876, %v880
    %vm883 = vcmp.ge.f32.partialorder %v877, %v880
    %vm884 = vcmp.ge.f32.partialorder %v878, %v880
    %vm885 = vmand %vm859, %vm881
    %vm886 = vmand %vm860, %vm882
    %vm887 = vmand %vm861, %vm883
    %vm888 = vmand %vm862, %vm884
    %vm889 = vmor %vm811, %vm885
    %vm890 = vmor %vm812, %vm886
    %vm891 = vmor %vm813, %vm887
    %vm892 = vmor %vm814, %vm888
    %s893 = sld [smem:[#allocation2 + $0x63]]
    %v894 = vstv %s893
    %v895 = vmul.f32 %v894, %v31
    %v896 = vmul.f32 %v894, %v32
    %v897 = vmul.f32 %v894, %v33
    %v898 = vmul.f32 %v894, %v34
    %s899 = sld [smem:[#allocation2 + $0x64]]
    %v900 = vstv %s899
    %v901 = vmul.f32 %v900, %v35
    %v902 = vmul.f32 %v900, %v36
    %v903 = vmul.f32 %v900, %v37
    %v904 = vmul.f32 %v900, %v38
    %v905 = vadd.f32 %v895, %v901
    %v906 = vadd.f32 %v896, %v902
    %v907 = vadd.f32 %v897, %v903
    %v908 = vadd.f32 %v898, %v904
    %s909 = sld [smem:[#allocation2 + $0x65]]
    %v910 = vstv %s909
    %vm911 = vcmp.ge.f32.partialorder %v905, %v910
    %vm912 = vcmp.ge.f32.partialorder %v906, %v910
    %vm913 = vcmp.ge.f32.partialorder %v907, %v910
    %vm914 = vcmp.ge.f32.partialorder %v908, %v910
    %s915 = sld [smem:[#allocation2 + $0x66]]
    %v916 = vstv %s915
    %v917 = vmul.f32 %v916, %v31
    %v918 = vmul.f32 %v916, %v32
    %v919 = vmul.f32 %v916, %v33
    %v920 = vmul.f32 %v916, %v34
    %s921 = sld [smem:[#allocation2 + $0x67]]
    %v922 = vstv %s921
    %v923 = vmul.f32 %v922, %v35
    %v924 = vmul.f32 %v922, %v36
    %v925 = vmul.f32 %v922, %v37
    %v926 = vmul.f32 %v922, %v38
    %v927 = vadd.f32 %v917, %v923
    %v928 = vadd.f32 %v918, %v924
    %v929 = vadd.f32 %v919, %v925
    %v930 = vadd.f32 %v920, %v926
    %s931 = sld [smem:[#allocation2 + $0x68]]
    %v932 = vstv %s931
    %vm933 = vcmp.ge.f32.partialorder %v927, %v932
    %vm934 = vcmp.ge.f32.partialorder %v928, %v932
    %vm935 = vcmp.ge.f32.partialorder %v929, %v932
    %vm936 = vcmp.ge.f32.partialorder %v930, %v932
    %vm937 = vmand %vm911, %vm933
    %vm938 = vmand %vm912, %vm934
    %vm939 = vmand %vm913, %vm935
    %vm940 = vmand %vm914, %vm936
    %s941 = sld [smem:[#allocation2 + $0x69]]
    %v942 = vstv %s941
    %v943 = vmul.f32 %v942, %v31
    %v944 = vmul.f32 %v942, %v32
    %v945 = vmul.f32 %v942, %v33
    %v946 = vmul.f32 %v942, %v34
    %s947 = sld [smem:[#allocation2 + $0x6a]]
    %v948 = vstv %s947
    %v949 = vmul.f32 %v948, %v35
    %v950 = vmul.f32 %v948, %v36
    %v951 = vmul.f32 %v948, %v37
    %v952 = vmul.f32 %v948, %v38
    %v953 = vadd.f32 %v943, %v949
    %v954 = vadd.f32 %v944, %v950
    %v955 = vadd.f32 %v945, %v951
    %v956 = vadd.f32 %v946, %v952
    %s957 = sld [smem:[#allocation2 + $0x6b]]
    %v958 = vstv %s957
    %vm959 = vcmp.ge.f32.partialorder %v953, %v958
    %vm960 = vcmp.ge.f32.partialorder %v954, %v958
    %vm961 = vcmp.ge.f32.partialorder %v955, %v958
    %vm962 = vcmp.ge.f32.partialorder %v956, %v958
    %vm963 = vmand %vm937, %vm959
    %vm964 = vmand %vm938, %vm960
    %vm965 = vmand %vm939, %vm961
    %vm966 = vmand %vm940, %vm962
    %vm967 = vmor %vm889, %vm963
    %vm968 = vmor %vm890, %vm964
    %vm969 = vmor %vm891, %vm965
    %vm970 = vmor %vm892, %vm966
    %v971 = vld [vmem:[%s3] sm:$0xff]
    %v972 = vld [vmem:[%s3 + $0x8] sm:$0xff]
    %v973 = vld [vmem:[%s3 + $0x10] sm:$0xff]
    %v974 = vld [vmem:[%s3 + $0x18] sm:$0xff]
    %v975 = vsel %vm967, %v971, 0.0
    %v976 = vsel %vm968, %v972, 0.0
    %v977 = vsel %vm969, %v973, 0.0
    %v978 = vsel %vm970, %v974, 0.0
    %v979 = vadd.f32 %v975, %v976
    %v980 = vadd.f32 %v979, %v977
    %v981 = vadd.f32 %v980, %v978
    %982 = vadd.xlane.f32.xlu0 %v981
    %v983 = vpop.xlane.xlu0 %982
    %v984 = vrot.slane %v983, 4
    %v985 = vadd.f32 %v983, %v984
    %v986 = vrot.slane %v985, 2
    %v987 = vadd.f32 %v985, %v986
    %v988 = vrot.slane %v987, 1
    %v989 = vadd.f32 %v987, %v988
    %s990 = vtos %v989
    %v991 = vstv %s990
    %vm992 = vcmask 0
    %993 = vst.msk [vmem:[#allocation5] sm:$0x1] %vm992, %v991
    // Predicated region
    $region22: #{model_forward.1} parent=1 // pred_check
      _
    $region23: #{model_forward.1} parent=1 // pred_check_branch
      %995 = sbr.rel (0) target = $region25
    $region24: #{model_forward.1} parent=1 // pred_region
      %s997 = ssub.s32 16, 16
      %998 = vsyncadd [#allocation3], %s997
      %s1000 = sshll.u32 [#allocation5], 4
      %s1001 = int_to_ptr.vmem [resolvable:$true] %s1000
      %1003 = dma.vmem_to_hbm [thread:$0]  %s1001, 16, %s4, [#allocation3]
    $region25: #{model_forward.1} parent=1 // pred_fallthru
      _
    // Predicated region
    $region26: #{model_forward.1} parent=1 // pred_check
      _
    $region27: #{model_forward.1} parent=1 // pred_check_branch
      %1005 = sbr.rel (0) target = $region29
    $region28: #{model_forward.1} parent=1 // pred_region
      %1006 = dma.done [#allocation3], 16
    $region29: #{model_forward.1} parent=1 // pred_fallthru
      _
    %1007 = vsyncpa [#allocation3], 1
    %1008 = vsyncpa [#allocation4], 1

</llo_original>
